<compile_context>
chip_gen: v7x
topology: tpu7x:2x2x1
jax: 0.10.0
libtpu: 0.0.40
codegen_flags: <defaults>
</compile_context>

<pallas_src>
import functools

import jax
import jax.numpy as jnp
import numpy as np
from jax.experimental import pallas as pl
from jax.experimental.pallas import tpu as pltpu

LANE = 128


def _round_up(x, m):
    return (x + m - 1) // m * m


def _pick_tile_h(ho, wo):
    """Largest divisor of Ho giving >=2 row bands (when possible) and a
    matmul M dim (tile_h * Wo) <= 512."""
    divs = [t for t in range(1, ho + 1) if ho % t == 0]
    good = [t for t in divs if t * wo <= 512] or [1]
    multi = [t for t in good if ho // t >= 2]
    pool = multi if multi else good
    return max(pool)


def _conv_bn_kernel(x_ref, w_ref, b_ref, o_ref, *, kernel, stride, tile_h):
    """Fused conv + folded-BN shift + ReLU6 for one (batch, row-band) tile.

    x_ref : (1, Hp, Wp, Cpi)   padded input, resident across row bands
    w_ref : (K, K, Cpi, Cpo)   bf16 weights, BN scale pre-folded
    b_ref : (1, Cpo)           folded BN shift (f32)
    o_ref : (1, TH, Wo, Cpo)   output row band
    """
    th, wo, cpo = o_ref.shape[1], o_ref.shape[2], o_ref.shape[3]
    cpi = x_ref.shape[3]

    h = pl.program_id(1)
    row0 = pl.multiple_of(h * (tile_h * stride), tile_h * stride)
    th_in = (tile_h - 1) * stride + kernel

    # Contiguous input row band needed by this output tile (dynamic offset on
    # the non-tiled H axis only; W/C are full slices).
    x_band = x_ref[0, pl.ds(row0, th_in), :, :]          # (th_in, Wp, Cpi) f32

    h_span = stride * (th - 1) + 1
    w_span = stride * (wo - 1) + 1

    def tap_matmul(kh, kw):
        patch = x_band[kh:kh + h_span:stride, kw:kw + w_span:stride, :]
        lhs = patch.reshape(th * wo, cpi).astype(jnp.bfloat16)
        return jnp.dot(lhs, w_ref[kh, kw], preferred_element_type=jnp.float32)

    # First tap initializes the accumulator (avoids zero-fill + add).
    acc = tap_matmul(0, 0)
    for kh in range(kernel):
        for kw in range(kernel):
            if kh == 0 and kw == 0:
                continue
            acc = acc + tap_matmul(kh, kw)

    # Folded BN shift + ReLU6 (scale already folded into the weights).
    y = jnp.clip(acc + b_ref[...], 0.0, 6.0)
    o_ref[0] = y.reshape(th, wo, cpo).astype(o_ref.dtype)


def conv_bn_forward(x_nchw, params, *, kernel, stride, padding):
    """Fused Conv2d(bias=False) + BatchNorm2d (inference) + ReLU6.

    Input/output are NCHW like the PyTorch module.
    """
    (w, gamma, beta, mean, var, eps) = params

    n, cin, hgt, wid = x_nchw.shape
    cout = w.shape[0]
    ho = (hgt + 2 * padding - kernel) // stride + 1
    wo = (wid + 2 * padding - kernel) // stride + 1

    cpi = _round_up(cin, LANE)
    cpo = _round_up(cout, LANE)
    tile_h = _pick_tile_h(ho, wo)
    nh = ho // tile_h

    # NCHW -> NHWC, spatial zero pad, lane-dense channel pad.
    # (For very small real Cin one might skip the Cin pad to save HBM traffic;
    #  at these shapes lane density wins.)
    x_nhwc = jnp.transpose(x_nchw, (0, 2, 3, 1))
    x_pad = jnp.pad(
        x_nhwc,
        ((0, 0), (padding, padding), (padding, padding), (0, cpi - cin)))
    hp, wp = x_pad.shape[1], x_pad.shape[2]

    # Fold BN (inference) into the weights: y = conv(x, w*s) + (beta - mean*s).
    s = gamma / jnp.sqrt(var + eps)                      # (Cout,)
    b = beta - mean * s                                  # (Cout,)

    # torch OIHW (Cout,Cin,K,K) -> (K,K,Cin,Cout), scale Cout columns, pad, bf16.
    w_kkio = jnp.transpose(w, (2, 3, 1, 0)) * s[None, None, None, :]
    w_kkio = jnp.pad(w_kkio, ((0, 0), (0, 0), (0, cpi - cin), (0, cpo - cout)))
    w_kkio = w_kkio.astype(jnp.bfloat16)

    b_pad = jnp.pad(b, (0, cpo - cout)).reshape(1, cpo).astype(jnp.float32)

    kern = functools.partial(_conv_bn_kernel, kernel=kernel, stride=stride,
                             tile_h=tile_h)

    out_nhwc = pl.pallas_call(
        kern,
        out_shape=jax.ShapeDtypeStruct((n, ho, wo, cpo), x_nchw.dtype),
        grid_spec=pltpu.PrefetchScalarGridSpec(
            num_scalar_prefetch=0,
            grid=(n, nh),
            in_specs=[
                # Full padded image per batch element; block index ignores the
                # row-band axis so the input stays resident in VMEM across it.
                pl.BlockSpec((1, hp, wp, cpi), lambda i, j: (i, 0, 0, 0)),
                pl.BlockSpec((kernel, kernel, cpi, cpo),
                             lambda i, j: (0, 0, 0, 0)),
                pl.BlockSpec((1, cpo), lambda i, j: (0, 0)),
            ],
            out_specs=pl.BlockSpec((1, tile_h, wo, cpo),
                                   lambda i, j: (i, j, 0, 0)),
        ),
        compiler_params=pltpu.CompilerParams(
            dimension_semantics=("parallel", "parallel")),
    )(x_pad, w_kkio, b_pad)

    # Drop channel padding, NHWC -> NCHW.
    return jnp.transpose(out_nhwc[..., :cout], (0, 3, 1, 2))


def _reference_forward(x_nchw, params, *, kernel, stride, padding):
    """Pure-JAX (XLA conv) reference for correctness checking."""
    (w, gamma, beta, mean, var, eps) = params
    y = jax.lax.conv_general_dilated(
        x_nchw, w, (stride, stride),
        [(padding, padding), (padding, padding)],
        dimension_numbers=("NCHW", "OIHW", "NCHW"))
    y = (y - mean[None, :, None, None]) / jnp.sqrt(var + eps)[None, :, None, None]
    y = y * gamma[None, :, None, None] + beta[None, :, None, None]
    return jnp.clip(y, 0.0, 6.0)


def _run_case(key, n, cin, cout, hgt, wid, kernel, stride, padding):
    keys = jax.random.split(key, 6)
    x = jax.random.normal(keys[0], (n, cin, hgt, wid), dtype=jnp.float32)
    w = 0.3 * jax.random.normal(keys[1], (cout, cin, kernel, kernel),
                                dtype=jnp.float32)
    gamma = 1.0 + 0.1 * jax.random.normal(keys[2], (cout,), dtype=jnp.float32)
    beta = 0.1 * jax.random.normal(keys[3], (cout,), dtype=jnp.float32)
    mean = 0.05 * jax.random.normal(keys[4], (cout,), dtype=jnp.float32)
    var = jnp.abs(1.0 + 0.1 * jax.random.normal(keys[5], (cout,),
                                                dtype=jnp.float32))
    eps = 1e-5
    params = (w, gamma, beta, mean, var, eps)

    out = conv_bn_forward(x, params, kernel=kernel, stride=stride,
                          padding=padding)
    out = jax.block_until_ready(out)
    ref = _reference_forward(x, params, kernel=kernel, stride=stride,
                             padding=padding)
    ref = jax.block_until_ready(ref)

    ho = (hgt + 2 * padding - kernel) // stride + 1
    wo = (wid + 2 * padding - kernel) // stride + 1
    assert out.shape == (n, cout, ho, wo), out.shape
    # bf16 MXU operands -> slightly loose tolerance.
    np.testing.assert_allclose(np.asarray(out), np.asarray(ref),
                               rtol=3e-2, atol=3e-2)


if __name__ == "__main__":
    key = jax.random.PRNGKey(0)
    k1, k2 = jax.random.split(key)
    # conv_bn(inp=4, oup=16, kernel=3, stride=1, padding=1) on (2, 4, 16, 16)
    _run_case(k1, n=2, cin=4, cout=16, hgt=16, wid=16,
              kernel=3, stride=1, padding=1)
    # conv_bn(inp=4, oup=8, kernel=3, stride=2, padding=1) on (2, 4, 16, 16)
    _run_case(k2, n=2, cin=4, cout=8, hgt=16, wid=16,
              kernel=3, stride=2, padding=1)
    print("KERNEL_OK")
</pallas_src>

<mosaic_0001>
module attributes {stable_mosaic.version = 11 : i64} {
  func.func @_conv_bn_kernel(%arg0: i32, %arg1: i32, %arg2: memref<1x18x18x128xf32, #tpu.memory_space<vmem>>, %arg3: memref<3x3x128x128xbf16, #tpu.memory_space<vmem>>, %arg4: memref<1x128xf32, #tpu.memory_space<vmem>>, %arg5: memref<1x8x16x128xf32, #tpu.memory_space<vmem>>) attributes {dimension_semantics = [#tpu.dimension_semantics<parallel>, #tpu.dimension_semantics<parallel>], iteration_bounds = array<i64: 2, 2>, scalar_prefetch = 0 : i64, scratch_operands = 0 : i64, tpu.core_type = #tpu.core_type<tc>, window_params = [{transform_indices = @transform_0, window_bounds = array<i64: 1, 18, 18, 128>}, {pipeline_mode = #tpu.pipeline_mode<synchronous>, transform_indices = @transform_1, window_bounds = array<i64: 3, 3, 128, 128>}, {pipeline_mode = #tpu.pipeline_mode<synchronous>, transform_indices = @transform_2, window_bounds = array<i64: 1, 128>}, {transform_indices = @transform_3, window_bounds = array<i64: 1, 8, 16, 128>}]} {
    %c8_i32 = arith.constant 8 : i32
    %0 = arith.muli %arg1, %c8_i32 : i32
    %1 = tpu.assume_multiple %0, 8 : i32
    %c0 = arith.constant 0 : index
    %2 = arith.index_cast %1 : i32 to index
    %c0_0 = arith.constant 0 : index
    %c0_1 = arith.constant 0 : index
    %3 = vector.load %arg2[%c0, %2, %c0_0, %c0_1] : memref<1x18x18x128xf32, #tpu.memory_space<vmem>>, vector<1x10x18x128xf32>
    %4 = vector.shape_cast %3 : vector<1x10x18x128xf32> to vector<10x18x128xf32>
    %5 = vector.extract_strided_slice %4 {offsets = [0, 0, 0], sizes = [8, 16, 128], strides = [1, 1, 1]} : vector<10x18x128xf32> to vector<8x16x128xf32>
    %6 = vector.shape_cast %5 : vector<8x16x128xf32> to vector<128x128xf32>
    %7 = arith.truncf %6 : vector<128x128xf32> to vector<128x128xbf16>
    %c0_2 = arith.constant 0 : index
    %c0_3 = arith.constant 0 : index
    %c0_4 = arith.constant 0 : index
    %c0_5 = arith.constant 0 : index
    %8 = vector.load %arg3[%c0_2, %c0_3, %c0_4, %c0_5] : memref<3x3x128x128xbf16, #tpu.memory_space<vmem>>, vector<1x1x128x128xbf16>
    %9 = vector.shape_cast %8 : vector<1x1x128x128xbf16> to vector<128x128xbf16>
    %cst = arith.constant dense<0.000000e+00> : vector<128x128xf32>
    %10 = tpu.matmul %7, %9, %cst {dimension_numbers = #tpu.dot_dimension_numbers<[1], [0], [0], [1], [0, 0, 1, 1], [], []>} : vector<128x128xbf16>, vector<128x128xbf16>, vector<128x128xf32> -> vector<128x128xf32>
    %11 = vector.extract_strided_slice %4 {offsets = [0, 1, 0], sizes = [8, 16, 128], strides = [1, 1, 1]} : vector<10x18x128xf32> to vector<8x16x128xf32>
    %12 = vector.shape_cast %11 : vector<8x16x128xf32> to vector<128x128xf32>
    %13 = arith.truncf %12 : vector<128x128xf32> to vector<128x128xbf16>
    %c0_6 = arith.constant 0 : index
    %c1 = arith.constant 1 : index
    %c0_7 = arith.constant 0 : index
    %c0_8 = arith.constant 0 : index
    %14 = vector.load %arg3[%c0_6, %c1, %c0_7, %c0_8] : memref<3x3x128x128xbf16, #tpu.memory_space<vmem>>, vector<1x1x128x128xbf16>
    %15 = vector.shape_cast %14 : vector<1x1x128x128xbf16> to vector<128x128xbf16>
    %cst_9 = arith.constant dense<0.000000e+00> : vector<128x128xf32>
    %16 = tpu.matmul %13, %15, %cst_9 {dimension_numbers = #tpu.dot_dimension_numbers<[1], [0], [0], [1], [0, 0, 1, 1], [], []>} : vector<128x128xbf16>, vector<128x128xbf16>, vector<128x128xf32> -> vector<128x128xf32>
    %17 = arith.addf %10, %16 : vector<128x128xf32>
    %18 = vector.extract_strided_slice %4 {offsets = [0, 2, 0], sizes = [8, 16, 128], strides = [1, 1, 1]} : vector<10x18x128xf32> to vector<8x16x128xf32>
    %19 = vector.shape_cast %18 : vector<8x16x128xf32> to vector<128x128xf32>
    %20 = arith.truncf %19 : vector<128x128xf32> to vector<128x128xbf16>
    %c0_10 = arith.constant 0 : index
    %c2 = arith.constant 2 : index
    %c0_11 = arith.constant 0 : index
    %c0_12 = arith.constant 0 : index
    %21 = vector.load %arg3[%c0_10, %c2, %c0_11, %c0_12] : memref<3x3x128x128xbf16, #tpu.memory_space<vmem>>, vector<1x1x128x128xbf16>
    %22 = vector.shape_cast %21 : vector<1x1x128x128xbf16> to vector<128x128xbf16>
    %cst_13 = arith.constant dense<0.000000e+00> : vector<128x128xf32>
    %23 = tpu.matmul %20, %22, %cst_13 {dimension_numbers = #tpu.dot_dimension_numbers<[1], [0], [0], [1], [0, 0, 1, 1], [], []>} : vector<128x128xbf16>, vector<128x128xbf16>, vector<128x128xf32> -> vector<128x128xf32>
    %24 = arith.addf %17, %23 : vector<128x128xf32>
    %25 = vector.extract_strided_slice %4 {offsets = [1, 0, 0], sizes = [8, 16, 128], strides = [1, 1, 1]} : vector<10x18x128xf32> to vector<8x16x128xf32>
    %26 = vector.shape_cast %25 : vector<8x16x128xf32> to vector<128x128xf32>
    %27 = arith.truncf %26 : vector<128x128xf32> to vector<128x128xbf16>
    %c1_14 = arith.constant 1 : index
    %c0_15 = arith.constant 0 : index
    %c0_16 = arith.constant 0 : index
    %c0_17 = arith.constant 0 : index
    %28 = vector.load %arg3[%c1_14, %c0_15, %c0_16, %c0_17] : memref<3x3x128x128xbf16, #tpu.memory_space<vmem>>, vector<1x1x128x128xbf16>
    %29 = vector.shape_cast %28 : vector<1x1x128x128xbf16> to vector<128x128xbf16>
    %cst_18 = arith.constant dense<0.000000e+00> : vector<128x128xf32>
    %30 = tpu.matmul %27, %29, %cst_18 {dimension_numbers = #tpu.dot_dimension_numbers<[1], [0], [0], [1], [0, 0, 1, 1], [], []>} : vector<128x128xbf16>, vector<128x128xbf16>, vector<128x128xf32> -> vector<128x128xf32>
    %31 = arith.addf %24, %30 : vector<128x128xf32>
    %32 = vector.extract_strided_slice %4 {offsets = [1, 1, 0], sizes = [8, 16, 128], strides = [1, 1, 1]} : vector<10x18x128xf32> to vector<8x16x128xf32>
    %33 = vector.shape_cast %32 : vector<8x16x128xf32> to vector<128x128xf32>
    %34 = arith.truncf %33 : vector<128x128xf32> to vector<128x128xbf16>
    %c1_19 = arith.constant 1 : index
    %c1_20 = arith.constant 1 : index
    %c0_21 = arith.constant 0 : index
    %c0_22 = arith.constant 0 : index
    %35 = vector.load %arg3[%c1_19, %c1_20, %c0_21, %c0_22] : memref<3x3x128x128xbf16, #tpu.memory_space<vmem>>, vector<1x1x128x128xbf16>
    %36 = vector.shape_cast %35 : vector<1x1x128x128xbf16> to vector<128x128xbf16>
    %cst_23 = arith.constant dense<0.000000e+00> : vector<128x128xf32>
    %37 = tpu.matmul %34, %36, %cst_23 {dimension_numbers = #tpu.dot_dimension_numbers<[1], [0], [0], [1], [0, 0, 1, 1], [], []>} : vector<128x128xbf16>, vector<128x128xbf16>, vector<128x128xf32> -> vector<128x128xf32>
    %38 = arith.addf %31, %37 : vector<128x128xf32>
    %39 = vector.extract_strided_slice %4 {offsets = [1, 2, 0], sizes = [8, 16, 128], strides = [1, 1, 1]} : vector<10x18x128xf32> to vector<8x16x128xf32>
    %40 = vector.shape_cast %39 : vector<8x16x128xf32> to vector<128x128xf32>
    %41 = arith.truncf %40 : vector<128x128xf32> to vector<128x128xbf16>
    %c1_24 = arith.constant 1 : index
    %c2_25 = arith.constant 2 : index
    %c0_26 = arith.constant 0 : index
    %c0_27 = arith.constant 0 : index
    %42 = vector.load %arg3[%c1_24, %c2_25, %c0_26, %c0_27] : memref<3x3x128x128xbf16, #tpu.memory_space<vmem>>, vector<1x1x128x128xbf16>
    %43 = vector.shape_cast %42 : vector<1x1x128x128xbf16> to vector<128x128xbf16>
    %cst_28 = arith.constant dense<0.000000e+00> : vector<128x128xf32>
    %44 = tpu.matmul %41, %43, %cst_28 {dimension_numbers = #tpu.dot_dimension_numbers<[1], [0], [0], [1], [0, 0, 1, 1], [], []>} : vector<128x128xbf16>, vector<128x128xbf16>, vector<128x128xf32> -> vector<128x128xf32>
    %45 = arith.addf %38, %44 : vector<128x128xf32>
    %46 = vector.extract_strided_slice %4 {offsets = [2, 0, 0], sizes = [8, 16, 128], strides = [1, 1, 1]} : vector<10x18x128xf32> to vector<8x16x128xf32>
    %47 = vector.shape_cast %46 : vector<8x16x128xf32> to vector<128x128xf32>
    %48 = arith.truncf %47 : vector<128x128xf32> to vector<128x128xbf16>
    %c2_29 = arith.constant 2 : index
    %c0_30 = arith.constant 0 : index
    %c0_31 = arith.constant 0 : index
    %c0_32 = arith.constant 0 : index
    %49 = vector.load %arg3[%c2_29, %c0_30, %c0_31, %c0_32] : memref<3x3x128x128xbf16, #tpu.memory_space<vmem>>, vector<1x1x128x128xbf16>
    %50 = vector.shape_cast %49 : vector<1x1x128x128xbf16> to vector<128x128xbf16>
    %cst_33 = arith.constant dense<0.000000e+00> : vector<128x128xf32>
    %51 = tpu.matmul %48, %50, %cst_33 {dimension_numbers = #tpu.dot_dimension_numbers<[1], [0], [0], [1], [0, 0, 1, 1], [], []>} : vector<128x128xbf16>, vector<128x128xbf16>, vector<128x128xf32> -> vector<128x128xf32>
    %52 = arith.addf %45, %51 : vector<128x128xf32>
    %53 = vector.extract_strided_slice %4 {offsets = [2, 1, 0], sizes = [8, 16, 128], strides = [1, 1, 1]} : vector<10x18x128xf32> to vector<8x16x128xf32>
    %54 = vector.shape_cast %53 : vector<8x16x128xf32> to vector<128x128xf32>
    %55 = arith.truncf %54 : vector<128x128xf32> to vector<128x128xbf16>
    %c2_34 = arith.constant 2 : index
    %c1_35 = arith.constant 1 : index
    %c0_36 = arith.constant 0 : index
    %c0_37 = arith.constant 0 : index
    %56 = vector.load %arg3[%c2_34, %c1_35, %c0_36, %c0_37] : memref<3x3x128x128xbf16, #tpu.memory_space<vmem>>, vector<1x1x128x128xbf16>
    %57 = vector.shape_cast %56 : vector<1x1x128x128xbf16> to vector<128x128xbf16>
    %cst_38 = arith.constant dense<0.000000e+00> : vector<128x128xf32>
    %58 = tpu.matmul %55, %57, %cst_38 {dimension_numbers = #tpu.dot_dimension_numbers<[1], [0], [0], [1], [0, 0, 1, 1], [], []>} : vector<128x128xbf16>, vector<128x128xbf16>, vector<128x128xf32> -> vector<128x128xf32>
    %59 = arith.addf %52, %58 : vector<128x128xf32>
    %60 = vector.extract_strided_slice %4 {offsets = [2, 2, 0], sizes = [8, 16, 128], strides = [1, 1, 1]} : vector<10x18x128xf32> to vector<8x16x128xf32>
    %61 = vector.shape_cast %60 : vector<8x16x128xf32> to vector<128x128xf32>
    %62 = arith.truncf %61 : vector<128x128xf32> to vector<128x128xbf16>
    %c2_39 = arith.constant 2 : index
    %c2_40 = arith.constant 2 : index
    %c0_41 = arith.constant 0 : index
    %c0_42 = arith.constant 0 : index
    %63 = vector.load %arg3[%c2_39, %c2_40, %c0_41, %c0_42] : memref<3x3x128x128xbf16, #tpu.memory_space<vmem>>, vector<1x1x128x128xbf16>
    %64 = vector.shape_cast %63 : vector<1x1x128x128xbf16> to vector<128x128xbf16>
    %cst_43 = arith.constant dense<0.000000e+00> : vector<128x128xf32>
    %65 = tpu.matmul %62, %64, %cst_43 {dimension_numbers = #tpu.dot_dimension_numbers<[1], [0], [0], [1], [0, 0, 1, 1], [], []>} : vector<128x128xbf16>, vector<128x128xbf16>, vector<128x128xf32> -> vector<128x128xf32>
    %66 = arith.addf %59, %65 : vector<128x128xf32>
    %c0_44 = arith.constant 0 : index
    %c0_45 = arith.constant 0 : index
    %67 = vector.load %arg4[%c0_44, %c0_45] : memref<1x128xf32, #tpu.memory_space<vmem>>, vector<1x128xf32>
    %68 = vector.broadcast %67 : vector<1x128xf32> to vector<128x128xf32>
    %69 = arith.addf %66, %68 : vector<128x128xf32>
    %cst_46 = arith.constant 0.000000e+00 : f32
    %cst_47 = arith.constant 6.000000e+00 : f32
    %70 = vector.broadcast %cst_46 : f32 to vector<128x128xf32>
    %71 = arith.maximumf %70, %69 : vector<128x128xf32>
    %72 = vector.broadcast %cst_47 : f32 to vector<128x128xf32>
    %73 = arith.minimumf %72, %71 : vector<128x128xf32>
    %74 = vector.shape_cast %73 : vector<128x128xf32> to vector<8x16x128xf32>
    %c0_48 = arith.constant 0 : index
    %c0_49 = arith.constant 0 : index
    %c0_50 = arith.constant 0 : index
    %c0_51 = arith.constant 0 : index
    %75 = vector.load %arg5[%c0_48, %c0_49, %c0_50, %c0_51] : memref<1x8x16x128xf32, #tpu.memory_space<vmem>>, vector<1x8x16x128xf32>
    %76 = vector.shape_cast %75 : vector<1x8x16x128xf32> to vector<8x16x128xf32>
    %77 = vector.shape_cast %74 : vector<8x16x128xf32> to vector<1x8x16x128xf32>
    tpu.vector_store %arg5[%c0_48, %c0_49, %c0_50, %c0_51], %77 {strides = array<i32>} : memref<1x8x16x128xf32, #tpu.memory_space<vmem>>, vector<1x8x16x128xf32>,
    return
  }
  func.func @transform_0(%arg0: i32, %arg1: i32) -> (i32, i32, i32, i32) {
    %c0_i32 = arith.constant 0 : i32
    %c0_i32_0 = arith.constant 0 : i32
    %c0_i32_1 = arith.constant 0 : i32
    %c0_i32_2 = arith.constant 0 : i32
    return %arg0, %c0_i32, %c0_i32_0, %c0_i32_1 : i32, i32, i32, i32
  }
  func.func @transform_1(%arg0: i32, %arg1: i32) -> (i32, i32, i32, i32) {
    %c0_i32 = arith.constant 0 : i32
    %c0_i32_0 = arith.constant 0 : i32
    %c0_i32_1 = arith.constant 0 : i32
    %c0_i32_2 = arith.constant 0 : i32
    %c0_i32_3 = arith.constant 0 : i32
    return %c0_i32, %c0_i32_0, %c0_i32_1, %c0_i32_2 : i32, i32, i32, i32
  }
  func.func @transform_2(%arg0: i32, %arg1: i32) -> (i32, i32) {
    %c0_i32 = arith.constant 0 : i32
    %c0_i32_0 = arith.constant 0 : i32
    %c0_i32_1 = arith.constant 0 : i32
    return %c0_i32, %c0_i32_0 : i32, i32
  }
  func.func @transform_3(%arg0: i32, %arg1: i32) -> (i32, i32, i32, i32) {
    %c0_i32 = arith.constant 0 : i32
    %c0_i32_0 = arith.constant 0 : i32
    %c0_i32_1 = arith.constant 0 : i32
    return %arg0, %arg1, %c0_i32, %c0_i32_0 : i32, i32, i32, i32
  }
}

</mosaic_0001>

<llo_original>
// kernel: tpu_custom_call.1
$region0: #{tpu_custom_call.1}
  #allocation0 [shape = 'u32[]', space=smem, size = 0x4, offset = 0x4, fixed_abs, tag = 'smem constant byte address 0x4 - core index']
  #allocation1 [shape = 'u32[144,128]{1,0:T(1,128)}', space=vmem, size = 0x12000, scoped, tag = 'internal scratch']
  %s0 = inlined_call_operand.vmem [shape: f32[2,18,18,128], index: 0, kind: input, shape index: {}]
  %s1 = inlined_call_operand.vmem [shape: bf16[3,3,128,128], index: 1, kind: input, shape index: {}]
  %s2 = inlined_call_operand.vmem [shape: f32[1,128], index: 2, kind: input, shape index: {}]
  %s3 = inlined_call_operand.hbm [shape: f32[2,16,16,128], index: 3, kind: output, shape index: {}]
  %s4 = sld [smem:[#allocation0]]
  $region45: #{tpu_custom_call.1} parent=0
    _
  %s6 = ssub.s32 1, %s4
  %s7 = scalar_select 0, %s6, %s4
  $region1: #{tpu_custom_call.1} parent=0
    #allocation2 [shape = 'u8[131072]{0}', space=vmem, size = 0x20000, scoped, tag = 'output window, operand 0']
    #allocation3 [shape = 's32[2]{0}', space=sflag, size = 0x8, scoped, tag = 'scoped memory for tpu_custom_call.1']
    %8 = vsyncpa [#allocation3], 0
    %s9 = scalar_lea.sflag [#allocation3], 1
    %10 = vsyncpa %s9, 0
    loop: start=0, step=1, limit=6
    $region2: #{tpu_custom_call.1} parent=1 // loop_pre_header
      _
    $region3: #{tpu_custom_call.1} parent=1 // loop_header
      %s12 = sphi 0, %s16
      %p13 = scmp.ge.s32.totalorder %s12, 6
      %s19 = sphi 0, %s31
      %s20 = sphi 0, %s27
      %s21 = sphi 0, %s19
      %s22 = sphi 0, %s20
      %s23 = sphi 0, %s21
      %s24 = sphi 0, %s22
      %s34 = sphi 0, %s36
      %s37 = sphi 0, %s34
      %s38 = sphi 0, %s37
      %s54 = sphi 0, %s38
      %s58 = sphi 0, %s58
      %s60 = sphi 0, %s58
      %s61 = sphi 0, %s60
      %s75 = sphi 0, %s61
      %s79 = sphi 0, %s79
      %s81 = sphi 0, %s79
      %s82 = sphi 0, %s81
      %s96 = sphi 0, %s82
      %s104 = sphi 0, %s106
      %s107 = sphi 0, %s104
      %s108 = sphi 0, %s107
      %s124 = sphi 0, %s108
    $region4: #{tpu_custom_call.1} parent=1 // loop_header_branch
      %15 = sbr.rel (%p13) target = $region8
    $region5: #{tpu_custom_call.1} parent=1 // loop_body
      %s17 = ssub.s32 %s12, 1
      %s18 = ssub.s32 %s12, 2
      %s25 = sadd.s32 1, %s20
      %p26 = scmp.ge.s32.totalorder %s25, 2
      %s27 = scalar_select %p26, 0, %s25
      %s28 = sadd.s32 1, %s19
      %s29 = scalar_select %p26, %s28, %s19
      %p30 = scmp.ge.s32.totalorder %s29, 2
      %s31 = scalar_select %p30, 0, %s29
      %s32 = ssub.s32 %s19, %s31
      %p33 = scmp.eq.s32.totalorder %s32, 0
      %s35 = sadd.s32 %s34, 1
      %s36 = scalar_select %p33, %s34, %s35
      %p39 = pneg %p33
      %p40 = scmp.eq.s32.totalorder %s12, 3
      %p41 = por %p39, %p40
      %p42 = scmp.ne.s32.totalorder %s34, %s37
      %p43 = scmp.eq.s32.totalorder %s12, 0
      %p44 = por %p42, %p43
      %p45 = scmp.ne.s32.totalorder %s34, %s37
      %p46 = scmp.eq.s32.totalorder %s17, 3
      %p47 = por %p45, %p46
      %p48 = scmp.ne.s32.totalorder %s37, %s38
      %p49 = scmp.eq.s32.totalorder %s17, 0
      %p50 = por %p48, %p49
      %p51 = scmp.ne.s32.totalorder %s37, %s38
      %p52 = scmp.eq.s32.totalorder %s18, 3
      %p53 = por %p51, %p52
      %p55 = scmp.ne.s32.totalorder %s38, %s54
      %p56 = scmp.eq.s32.totalorder %s18, 0
      %p57 = por %p55, %p56
      %s59 = sadd.s32 %s58, 1
      %p62 = scmp.eq.s32.totalorder %s12, 3
      %p63 = scmp.ne.s32.totalorder %s58, %s60
      %p64 = scmp.eq.s32.totalorder %s12, 0
      %p65 = por %p63, %p64
      %p66 = scmp.ne.s32.totalorder %s58, %s60
      %p67 = scmp.eq.s32.totalorder %s17, 3
      %p68 = por %p66, %p67
      %p69 = scmp.ne.s32.totalorder %s60, %s61
      %p70 = scmp.eq.s32.totalorder %s17, 0
      %p71 = por %p69, %p70
      %p72 = scmp.ne.s32.totalorder %s60, %s61
      %p73 = scmp.eq.s32.totalorder %s18, 3
      %p74 = por %p72, %p73
      %p76 = scmp.ne.s32.totalorder %s61, %s75
      %p77 = scmp.eq.s32.totalorder %s18, 0
      %p78 = por %p76, %p77
      %s80 = sadd.s32 %s79, 1
      %p83 = scmp.eq.s32.totalorder %s12, 3
      %p84 = scmp.ne.s32.totalorder %s79, %s81
      %p85 = scmp.eq.s32.totalorder %s12, 0
      %p86 = por %p84, %p85
      %p87 = scmp.ne.s32.totalorder %s79, %s81
      %p88 = scmp.eq.s32.totalorder %s17, 3
      %p89 = por %p87, %p88
      %p90 = scmp.ne.s32.totalorder %s81, %s82
      %p91 = scmp.eq.s32.totalorder %s17, 0
      %p92 = por %p90, %p91
      %p93 = scmp.ne.s32.totalorder %s81, %s82
      %p94 = scmp.eq.s32.totalorder %s18, 3
      %p95 = por %p93, %p94
      %p97 = scmp.ne.s32.totalorder %s82, %s96
      %p98 = scmp.eq.s32.totalorder %s18, 0
      %p99 = por %p97, %p98
      %s100 = ssub.s32 %s19, %s31
      %s101 = ssub.s32 %s20, %s27
      %s102 = sor.u32 %s100, %s101
      %p103 = scmp.eq.s32.totalorder %s102, 0
      %s105 = sadd.s32 %s104, 1
      %s106 = scalar_select %p103, %s104, %s105
      %p109 = pneg %p103
      %p110 = scmp.eq.s32.totalorder %s12, 3
      %p111 = por %p109, %p110
      %p112 = scmp.ne.s32.totalorder %s104, %s107
      %p113 = scmp.eq.s32.totalorder %s12, 0
      %p114 = por %p112, %p113
      %p115 = scmp.ne.s32.totalorder %s104, %s107
      %p116 = scmp.eq.s32.totalorder %s17, 3
      %p117 = por %p115, %p116
      %p118 = scmp.ne.s32.totalorder %s107, %s108
      %p119 = scmp.eq.s32.totalorder %s17, 0
      %p120 = por %p118, %p119
      %p121 = scmp.ne.s32.totalorder %s107, %s108
      %p122 = scmp.eq.s32.totalorder %s18, 3
      %p123 = por %p121, %p122
      %p125 = scmp.ne.s32.totalorder %s108, %s124
      %p126 = scmp.eq.s32.totalorder %s18, 0
      %p127 = por %p125, %p126
      %p128 = scmp.le.s32.totalorder 1, %s12
      %p129 = scmp.lt.s32.totalorder %s12, 5
      %p130 = pnand %p128, %p129
      %p131 = pneg %p130
      // Predicated region
      $region9: #{tpu_custom_call.1} parent=5 // pred_check
        _
      $region10: #{tpu_custom_call.1} parent=5 // pred_check_branch
        %133 = sbr.rel (%p130) target = $region12
      $region11: #{tpu_custom_call.1} parent=5 // pred_region
        %s134 = ssub.s32 %s12, 1
        // Predicated region
        $region13: #{tpu_custom_call.1} parent=11 // pred_check
          %p135 = pneg %p71
        $region14: #{tpu_custom_call.1} parent=11 // pred_check_branch
          %137 = sbr.rel (%p135) target = $region16
        $region15: #{tpu_custom_call.1} parent=11 // pred_region
          _
        $region16: #{tpu_custom_call.1} parent=11 // pred_fallthru
          _
        // Predicated region
        $region17: #{tpu_custom_call.1} parent=11 // pred_check
          %p138 = pneg %p92
        $region18: #{tpu_custom_call.1} parent=11 // pred_check_branch
          %140 = sbr.rel (%p138) target = $region20
        $region19: #{tpu_custom_call.1} parent=11 // pred_region
          _
        $region20: #{tpu_custom_call.1} parent=11 // pred_fallthru
          _
      $region12: #{tpu_custom_call.1} parent=5 // pred_fallthru
        _
      %p141 = scmp.lt.s32.totalorder %s12, 4
      // Predicated region
      $region21: #{tpu_custom_call.1} parent=5 // pred_check
        %p142 = pneg %p141
      $region22: #{tpu_custom_call.1} parent=5 // pred_check_branch
        %144 = sbr.rel (%p142) target = $region24
      $region23: #{tpu_custom_call.1} parent=5 // pred_region
        // Predicated region
        $region25: #{tpu_custom_call.1} parent=23 // pred_check
          %p145 = pneg %p44
        $region26: #{tpu_custom_call.1} parent=23 // pred_check_branch
          %147 = sbr.rel (%p145) target = $region28
        $region27: #{tpu_custom_call.1} parent=23 // pred_region
          %p148 = scmp.lt.s32.totalorder %s19, 1
          %s149 = scalar_select %p148, %s19, 1
          %s150 = smul.addr %s149, 54
          %s151 = smul.addr %s150, 8
          %s152 = scalar_lea.vmem %s0, %s151
        $region28: #{tpu_custom_call.1} parent=23 // pred_fallthru
          _
      $region24: #{tpu_custom_call.1} parent=5 // pred_fallthru
        _
      %p153 = scmp.le.s32.totalorder 1, %s12
      %p154 = scmp.lt.s32.totalorder %s12, 5
      %p155 = pnand %p153, %p154
      %p156 = pneg %p155
      // Predicated region
      $region29: #{tpu_custom_call.1} parent=5 // pred_check
        _
      $region30: #{tpu_custom_call.1} parent=5 // pred_check_branch
        %158 = sbr.rel (%p155) target = $region32
      $region31: #{tpu_custom_call.1} parent=5 // pred_region
        %s159 = ssub.s32 %s12, 1
        %p160 = scmp.lt.s32.totalorder %s21, 1
        %s161 = scalar_select %p160, %s21, 1
        %s162 = smul.addr %s161, 54
        %s163 = smul.addr %s162, 8
        %s164 = scalar_lea.vmem %s0, %s163
        %p165 = pneg %p50
        %p166 = pneg %p47
        %p167 = pneg %p71
        %p168 = pneg %p68
        %p169 = pneg %p92
        %p170 = pneg %p89
        %p171 = pneg %p120
        %p172 = pneg %p117
        %s173 = sand.u32 %s107, 1
        %s174 = scalar_lea.sflag [#allocation3], %s173
        %s175 = sand.u32 %s107, 1
        %s176 = smul.addr %s175, 128
        %s177 = scalar_lea.vmem [#allocation2], %s176
        %p178 = scmp.lt.s32.totalorder %s21, 1
        %s179 = scalar_select %p178, %s21, 1
        %s180 = smul.addr %s179, 54
        %s181 = smul.addr %s180, 8
        %s182 = scalar_lea.vmem %s0, %s181
        %s183 = smul.u32 8, %s22
        %s185 = smul.u32 %s22, 8
        %s186 = smul.u32 %s185, 24
        %s187 = scalar_lea.vmem %s182, %s186
        %v188 = vld [vmem:[%s187] sm:$0xff]
        %v189 = vld [vmem:[%s187 + $0x8] sm:$0xff]
        %v190 = vld [vmem:[%s187 + $0x10] sm:$0x3]
        %v191 = vld [vmem:[%s187 + $0x18] sm:$0xff]
        %v192 = vld [vmem:[%s187 + $0x20] sm:$0xff]
        %v193 = vld [vmem:[%s187 + $0x28] sm:$0x3]
        %v194 = vld [vmem:[%s187 + $0x30] sm:$0xff]
        %v195 = vld [vmem:[%s187 + $0x38] sm:$0xff]
        %v196 = vld [vmem:[%s187 + $0x40] sm:$0x3]
        %v197 = vld [vmem:[%s187 + $0x48] sm:$0xff]
        %v198 = vld [vmem:[%s187 + $0x50] sm:$0xff]
        %v199 = vld [vmem:[%s187 + $0x58] sm:$0x3]
        %v200 = vld [vmem:[%s187 + $0x60] sm:$0xff]
        %v201 = vld [vmem:[%s187 + $0x68] sm:$0xff]
        %v202 = vld [vmem:[%s187 + $0x70] sm:$0x3]
        %v203 = vld [vmem:[%s187 + $0x78] sm:$0xff]
        %v204 = vld [vmem:[%s187 + $0x80] sm:$0xff]
        %v205 = vld [vmem:[%s187 + $0x88] sm:$0x3]
        %v206 = vld [vmem:[%s187 + $0x90] sm:$0xff]
        %v207 = vld [vmem:[%s187 + $0x98] sm:$0xff]
        %v208 = vld [vmem:[%s187 + $0xa0] sm:$0x3]
        %v209 = vld [vmem:[%s187 + $0xa8] sm:$0xff]
        %v210 = vld [vmem:[%s187 + $0xb0] sm:$0xff]
        %v211 = vld [vmem:[%s187 + $0xb8] sm:$0x3]
        %v212 = vld [vmem:[%s187 + $0xc0] sm:$0xff]
        %v213 = vld [vmem:[%s187 + $0xc8] sm:$0xff]
        %v214 = vld [vmem:[%s187 + $0xd0] sm:$0x3]
        %v215 = vld [vmem:[%s187 + $0xd8] sm:$0xff]
        %v216 = vld [vmem:[%s187 + $0xe0] sm:$0xff]
        %v217 = vld [vmem:[%s187 + $0xe8] sm:$0x3]
        %v218 = vpack.c.bf16 %v189, %v188
        %v219 = vpack.c.bf16 %v192, %v191
        %v220 = vpack.c.bf16 %v195, %v194
        %v221 = vpack.c.bf16 %v198, %v197
        %v222 = vpack.c.bf16 %v201, %v200
        %v223 = vpack.c.bf16 %v204, %v203
        %v224 = vpack.c.bf16 %v207, %v206
        %v225 = vpack.c.bf16 %v210, %v209
        %v226 = vld [vmem:[%s1] sm:$0xf]
        %v227 = vld [vmem:[%s1 + $0x4] sm:$0xf]
        %v228 = vld [vmem:[%s1 + $0x8] sm:$0xf]
        %v229 = vld [vmem:[%s1 + $0xc] sm:$0xf]
        %v230 = vld [vmem:[%s1 + $0x10] sm:$0xf]
        %v231 = vld [vmem:[%s1 + $0x14] sm:$0xf]
        %v232 = vld [vmem:[%s1 + $0x18] sm:$0xf]
        %v233 = vld [vmem:[%s1 + $0x1c] sm:$0xf]
        %v234 = vld [vmem:[%s1 + $0x20] sm:$0xf]
        %v235 = vld [vmem:[%s1 + $0x24] sm:$0xf]
        %v236 = vld [vmem:[%s1 + $0x28] sm:$0xf]
        %v237 = vld [vmem:[%s1 + $0x2c] sm:$0xf]
        %v238 = vld [vmem:[%s1 + $0x30] sm:$0xf]
        %v239 = vld [vmem:[%s1 + $0x34] sm:$0xf]
        %v240 = vld [vmem:[%s1 + $0x38] sm:$0xf]
        %v241 = vld [vmem:[%s1 + $0x3c] sm:$0xf]
        %vm266 = vcmask 1046528
        %v267 = vrot.slane %v188, 1
        %v268 = vrot.slane %v189, 1
        %v269 = vsel %vm266, %v267, %v268
        %v270 = vrot.slane %v190, 1
        %v271 = vsel %vm266, %v268, %v270
        %v272 = vrot.slane %v191, 1
        %v273 = vrot.slane %v192, 1
        %v274 = vsel %vm266, %v272, %v273
        %v275 = vrot.slane %v193, 1
        %v276 = vsel %vm266, %v273, %v275
        %v277 = vrot.slane %v194, 1
        %v278 = vrot.slane %v195, 1
        %v279 = vsel %vm266, %v277, %v278
        %v280 = vrot.slane %v196, 1
        %v281 = vsel %vm266, %v278, %v280
        %v282 = vrot.slane %v197, 1
        %v283 = vrot.slane %v198, 1
        %v284 = vsel %vm266, %v282, %v283
        %v285 = vrot.slane %v199, 1
        %v286 = vsel %vm266, %v283, %v285
        %v287 = vrot.slane %v200, 1
        %v288 = vrot.slane %v201, 1
        %v289 = vsel %vm266, %v287, %v288
        %v290 = vrot.slane %v202, 1
        %v291 = vsel %vm266, %v288, %v290
        %v292 = vrot.slane %v203, 1
        %v293 = vrot.slane %v204, 1
        %v294 = vsel %vm266, %v292, %v293
        %v295 = vrot.slane %v205, 1
        %v296 = vsel %vm266, %v293, %v295
        %v297 = vrot.slane %v206, 1
        %v298 = vrot.slane %v207, 1
        %v299 = vsel %vm266, %v297, %v298
        %v300 = vrot.slane %v208, 1
        %v301 = vsel %vm266, %v298, %v300
        %v302 = vrot.slane %v209, 1
        %v303 = vrot.slane %v210, 1
        %v304 = vsel %vm266, %v302, %v303
        %v305 = vrot.slane %v211, 1
        %v306 = vsel %vm266, %v303, %v305
        %v323 = vpack.c.bf16 %v271, %v269
        %v324 = vpack.c.bf16 %v276, %v274
        %v325 = vpack.c.bf16 %v281, %v279
        %v326 = vpack.c.bf16 %v286, %v284
        %v327 = vpack.c.bf16 %v291, %v289
        %v328 = vpack.c.bf16 %v296, %v294
        %v329 = vpack.c.bf16 %v301, %v299
        %v330 = vpack.c.bf16 %v306, %v304
        %s331 = scalar_lea.vmem %s1, 64
        %v332 = vld [vmem:[%s331] sm:$0xf]
        %v333 = vld [vmem:[%s331 + $0x4] sm:$0xf]
        %v334 = vld [vmem:[%s331 + $0x8] sm:$0xf]
        %v335 = vld [vmem:[%s331 + $0xc] sm:$0xf]
        %v336 = vld [vmem:[%s331 + $0x10] sm:$0xf]
        %v337 = vld [vmem:[%s331 + $0x14] sm:$0xf]
        %v338 = vld [vmem:[%s331 + $0x18] sm:$0xf]
        %v339 = vld [vmem:[%s331 + $0x1c] sm:$0xf]
        %v340 = vld [vmem:[%s331 + $0x20] sm:$0xf]
        %v341 = vld [vmem:[%s331 + $0x24] sm:$0xf]
        %v342 = vld [vmem:[%s331 + $0x28] sm:$0xf]
        %v343 = vld [vmem:[%s331 + $0x2c] sm:$0xf]
        %v344 = vld [vmem:[%s331 + $0x30] sm:$0xf]
        %v345 = vld [vmem:[%s331 + $0x34] sm:$0xf]
        %v346 = vld [vmem:[%s331 + $0x38] sm:$0xf]
        %v347 = vld [vmem:[%s331 + $0x3c] sm:$0xf]
        %v364 = vunpack.c.l.b16 %v332
        %v365 = vunpack.c.l.b16 %v333
        %v366 = vunpack.c.l.b16 %v334
        %v367 = vunpack.c.l.b16 %v335
        %v368 = vunpack.c.l.b16 %v336
        %v369 = vunpack.c.l.b16 %v337
        %v370 = vunpack.c.l.b16 %v338
        %v371 = vunpack.c.l.b16 %v339
        %v372 = vunpack.c.l.b16 %v340
        %v373 = vunpack.c.l.b16 %v341
        %v374 = vunpack.c.l.b16 %v342
        %v375 = vunpack.c.l.b16 %v343
        %v376 = vunpack.c.l.b16 %v344
        %v377 = vunpack.c.l.b16 %v345
        %v378 = vunpack.c.l.b16 %v346
        %v379 = vunpack.c.l.b16 %v347
        %v380 = vpack.c.b16 %v365, %v364
        %v381 = vpack.c.b16 %v367, %v366
        %v382 = vpack.c.b16 %v369, %v368
        %v383 = vpack.c.b16 %v371, %v370
        %v384 = vpack.c.b16 %v373, %v372
        %v385 = vpack.c.b16 %v375, %v374
        %v386 = vpack.c.b16 %v377, %v376
        %v387 = vpack.c.b16 %v379, %v378
        %396 = vmatprep.subr.bf16.mxu0 0
        %397 = vmatpush1.bf16.msra.mxu0 %v380
        %398 = vmatprep.subr.bf16.mxu0 0
        %399 = vmatpush1.bf16.msra.mxu0 %v381
        %400 = vmatprep.subr.bf16.mxu0 0
        %401 = vmatpush1.bf16.msra.mxu0 %v382
        %402 = vmatprep.subr.bf16.mxu0 0
        %403 = vmatpush1.bf16.msra.mxu0 %v383
        %404 = vmatprep.subr.bf16.mxu0 0
        %405 = vmatpush1.bf16.msra.mxu0 %v384
        %406 = vmatprep.subr.bf16.mxu0 0
        %407 = vmatpush1.bf16.msra.mxu0 %v385
        %408 = vmatprep.subr.bf16.mxu0 0
        %409 = vmatpush1.bf16.msra.mxu0 %v386
        %410 = vmatprep.subr.bf16.mxu0 0
        %411 = vmatpush1.bf16.msra.mxu0 %v387
        %412 = vmatprep.subr.bf16.mxu0 0
        %413 = vmatpush1.bf16.msra.mxu0 0
        %414 = vmatprep.subr.bf16.mxu0 0
        %415 = vmatpush1.bf16.msra.mxu0 0
        %416 = vmatprep.subr.bf16.mxu0 0
        %417 = vmatpush1.bf16.msra.mxu0 0
        %418 = vmatprep.subr.bf16.mxu0 0
        %419 = vmatpush1.bf16.msra.mxu0 0
        %420 = vmatprep.subr.bf16.mxu0 0
        %421 = vmatpush1.bf16.msra.mxu0 0
        %422 = vmatprep.subr.bf16.mxu0 0
        %423 = vmatpush1.bf16.msra.mxu0 0
        %424 = vmatprep.subr.bf16.mxu0 0
        %425 = vmatpush1.bf16.msra.mxu0 0
        %426 = vmatprep.subr.bf16.mxu0 0
        %427 = vmatpush1.bf16.msra.mxu0 0
        %428 = vmatprep.mubr.bf16.mxu0 0
        %429 = vmatmul.mubr.bf16.gmra.mrb[0].mxu0 %v323
        %v430 = vpop.f32.mrb[0].mxu0
        %v431 = vadd.f32 0.0, %v430
        %v432 = vpop.f32.mrb[0].mxu0
        %v433 = vpop.f32.mrb[0].mxu0
        %v434 = vadd.f32 0.0, %v433
        %v435 = vpop.f32.mrb[0].mxu0
        %436 = vmatprep.mubr.bf16.mxu0 0
        %437 = vmatmul.mubr.bf16.gmra.mrb[0].mxu0 %v324
        %v438 = vpop.f32.mrb[0].mxu0
        %v439 = vadd.f32 0.0, %v438
        %v440 = vpop.f32.mrb[0].mxu0
        %v441 = vpop.f32.mrb[0].mxu0
        %v442 = vadd.f32 0.0, %v441
        %v443 = vpop.f32.mrb[0].mxu0
        %444 = vmatprep.mubr.bf16.mxu0 0
        %445 = vmatmul.mubr.bf16.gmra.mrb[0].mxu0 %v325
        %v446 = vpop.f32.mrb[0].mxu0
        %v447 = vadd.f32 0.0, %v446
        %v448 = vpop.f32.mrb[0].mxu0
        %v449 = vpop.f32.mrb[0].mxu0
        %v450 = vadd.f32 0.0, %v449
        %v451 = vpop.f32.mrb[0].mxu0
        %452 = vmatprep.mubr.bf16.mxu0 0
        %453 = vmatmul.mubr.bf16.gmra.mrb[0].mxu0 %v326
        %v454 = vpop.f32.mrb[0].mxu0
        %v455 = vadd.f32 0.0, %v454
        %v456 = vpop.f32.mrb[0].mxu0
        %v457 = vpop.f32.mrb[0].mxu0
        %v458 = vadd.f32 0.0, %v457
        %v459 = vpop.f32.mrb[0].mxu0
        %460 = vmatprep.mubr.bf16.mxu0 0
        %461 = vmatmul.mubr.bf16.gmra.mrb[0].mxu0 %v327
        %v462 = vpop.f32.mrb[0].mxu0
        %v463 = vadd.f32 0.0, %v462
        %v464 = vpop.f32.mrb[0].mxu0
        %v465 = vpop.f32.mrb[0].mxu0
        %v466 = vadd.f32 0.0, %v465
        %v467 = vpop.f32.mrb[0].mxu0
        %468 = vmatprep.mubr.bf16.mxu0 0
        %469 = vmatmul.mubr.bf16.gmra.mrb[0].mxu0 %v328
        %v470 = vpop.f32.mrb[0].mxu0
        %v471 = vadd.f32 0.0, %v470
        %v472 = vpop.f32.mrb[0].mxu0
        %v473 = vpop.f32.mrb[0].mxu0
        %v474 = vadd.f32 0.0, %v473
        %v475 = vpop.f32.mrb[0].mxu0
        %476 = vmatprep.mubr.bf16.mxu0 0
        %477 = vmatmul.mubr.bf16.gmra.mrb[0].mxu0 %v329
        %v478 = vpop.f32.mrb[0].mxu0
        %v479 = vadd.f32 0.0, %v478
        %v480 = vpop.f32.mrb[0].mxu0
        %v481 = vpop.f32.mrb[0].mxu0
        %v482 = vadd.f32 0.0, %v481
        %v483 = vpop.f32.mrb[0].mxu0
        %484 = vmatprep.mubr.bf16.mxu0 0
        %485 = vmatmul.mubr.bf16.gmra.mrb[0].mxu0 %v330
        %v486 = vpop.f32.mrb[0].mxu0
        %v487 = vadd.f32 0.0, %v486
        %v488 = vpop.f32.mrb[0].mxu0
        %v489 = vpop.f32.mrb[0].mxu0
        %v490 = vadd.f32 0.0, %v489
        %v491 = vpop.f32.mrb[0].mxu0
        %492 = vdwg.mxu0
        %v509 = vunpack.c.l.b16 %v226
        %v510 = vunpack.c.l.b16 %v227
        %v511 = vunpack.c.l.b16 %v228
        %v512 = vunpack.c.l.b16 %v229
        %v513 = vunpack.c.l.b16 %v230
        %v514 = vunpack.c.l.b16 %v231
        %v515 = vunpack.c.l.b16 %v232
        %v516 = vunpack.c.l.b16 %v233
        %v517 = vunpack.c.l.b16 %v234
        %v518 = vunpack.c.l.b16 %v235
        %v519 = vunpack.c.l.b16 %v236
        %v520 = vunpack.c.l.b16 %v237
        %v521 = vunpack.c.l.b16 %v238
        %v522 = vunpack.c.l.b16 %v239
        %v523 = vunpack.c.l.b16 %v240
        %v524 = vunpack.c.l.b16 %v241
        %v525 = vpack.c.b16 %v510, %v509
        %v526 = vpack.c.b16 %v512, %v511
        %v527 = vpack.c.b16 %v514, %v513
        %v528 = vpack.c.b16 %v516, %v515
        %v529 = vpack.c.b16 %v518, %v517
        %v530 = vpack.c.b16 %v520, %v519
        %v531 = vpack.c.b16 %v522, %v521
        %v532 = vpack.c.b16 %v524, %v523
        %541 = vmatprep.subr.bf16.mxu0 0
        %542 = vmatpush1.bf16.msra.mxu0 %v525
        %543 = vmatprep.subr.bf16.mxu0 0
        %544 = vmatpush1.bf16.msra.mxu0 %v526
        %545 = vmatprep.subr.bf16.mxu0 0
        %546 = vmatpush1.bf16.msra.mxu0 %v527
        %547 = vmatprep.subr.bf16.mxu0 0
        %548 = vmatpush1.bf16.msra.mxu0 %v528
        %549 = vmatprep.subr.bf16.mxu0 0
        %550 = vmatpush1.bf16.msra.mxu0 %v529
        %551 = vmatprep.subr.bf16.mxu0 0
        %552 = vmatpush1.bf16.msra.mxu0 %v530
        %553 = vmatprep.subr.bf16.mxu0 0
        %554 = vmatpush1.bf16.msra.mxu0 %v531
        %555 = vmatprep.subr.bf16.mxu0 0
        %556 = vmatpush1.bf16.msra.mxu0 %v532
        %557 = vmatprep.subr.bf16.mxu0 0
        %558 = vmatpush1.bf16.msra.mxu0 0
        %559 = vmatprep.subr.bf16.mxu0 0
        %560 = vmatpush1.bf16.msra.mxu0 0
        %561 = vmatprep.subr.bf16.mxu0 0
        %562 = vmatpush1.bf16.msra.mxu0 0
        %563 = vmatprep.subr.bf16.mxu0 0
        %564 = vmatpush1.bf16.msra.mxu0 0
        %565 = vmatprep.subr.bf16.mxu0 0
        %566 = vmatpush1.bf16.msra.mxu0 0
        %567 = vmatprep.subr.bf16.mxu0 0
        %568 = vmatpush1.bf16.msra.mxu0 0
        %569 = vmatprep.subr.bf16.mxu0 0
        %570 = vmatpush1.bf16.msra.mxu0 0
        %571 = vmatprep.subr.bf16.mxu0 0
        %572 = vmatpush1.bf16.msra.mxu0 0
        %573 = vmatprep.mubr.bf16.mxu0 0
        %574 = vmatmul.mubr.bf16.gmra.mrb[0].mxu0 %v218
        %v575 = vpop.f32.mrb[0].mxu0
        %v576 = vadd.f32 %v431, %v575
        %v577 = vpop.f32.mrb[0].mxu0
        %v578 = vpop.f32.mrb[0].mxu0
        %v579 = vadd.f32 %v434, %v578
        %v580 = vpop.f32.mrb[0].mxu0
        %581 = vmatprep.mubr.bf16.mxu0 0
        %582 = vmatmul.mubr.bf16.gmra.mrb[0].mxu0 %v219
        %v583 = vpop.f32.mrb[0].mxu0
        %v584 = vadd.f32 %v439, %v583
        %v585 = vpop.f32.mrb[0].mxu0
        %v586 = vpop.f32.mrb[0].mxu0
        %v587 = vadd.f32 %v442, %v586
        %v588 = vpop.f32.mrb[0].mxu0
        %589 = vmatprep.mubr.bf16.mxu0 0
        %590 = vmatmul.mubr.bf16.gmra.mrb[0].mxu0 %v220
        %v591 = vpop.f32.mrb[0].mxu0
        %v592 = vadd.f32 %v447, %v591
        %v593 = vpop.f32.mrb[0].mxu0
        %v594 = vpop.f32.mrb[0].mxu0
        %v595 = vadd.f32 %v450, %v594
        %v596 = vpop.f32.mrb[0].mxu0
        %597 = vmatprep.mubr.bf16.mxu0 0
        %598 = vmatmul.mubr.bf16.gmra.mrb[0].mxu0 %v221
        %v599 = vpop.f32.mrb[0].mxu0
        %v600 = vadd.f32 %v455, %v599
        %v601 = vpop.f32.mrb[0].mxu0
        %v602 = vpop.f32.mrb[0].mxu0
        %v603 = vadd.f32 %v458, %v602
        %v604 = vpop.f32.mrb[0].mxu0
        %605 = vmatprep.mubr.bf16.mxu0 0
        %606 = vmatmul.mubr.bf16.gmra.mrb[0].mxu0 %v222
        %v607 = vpop.f32.mrb[0].mxu0
        %v608 = vadd.f32 %v463, %v607
        %v609 = vpop.f32.mrb[0].mxu0
        %v610 = vpop.f32.mrb[0].mxu0
        %v611 = vadd.f32 %v466, %v610
        %v612 = vpop.f32.mrb[0].mxu0
        %613 = vmatprep.mubr.bf16.mxu0 0
        %614 = vmatmul.mubr.bf16.gmra.mrb[0].mxu0 %v223
        %v615 = vpop.f32.mrb[0].mxu0
        %v616 = vadd.f32 %v471, %v615
        %v617 = vpop.f32.mrb[0].mxu0
        %v618 = vpop.f32.mrb[0].mxu0
        %v619 = vadd.f32 %v474, %v618
        %v620 = vpop.f32.mrb[0].mxu0
        %621 = vmatprep.mubr.bf16.mxu0 0
        %622 = vmatmul.mubr.bf16.gmra.mrb[0].mxu0 %v224
        %v623 = vpop.f32.mrb[0].mxu0
        %v624 = vadd.f32 %v479, %v623
        %v625 = vpop.f32.mrb[0].mxu0
        %v626 = vpop.f32.mrb[0].mxu0
        %v627 = vadd.f32 %v482, %v626
        %v628 = vpop.f32.mrb[0].mxu0
        %629 = vmatprep.mubr.bf16.mxu0 0
        %630 = vmatmul.mubr.bf16.gmra.mrb[0].mxu0 %v225
        %v631 = vpop.f32.mrb[0].mxu0
        %v632 = vadd.f32 %v487, %v631
        %v633 = vpop.f32.mrb[0].mxu0
        %v634 = vpop.f32.mrb[0].mxu0
        %v635 = vadd.f32 %v490, %v634
        %v636 = vpop.f32.mrb[0].mxu0
        %637 = vdwg.mxu0
        %vm638 = vcmask 1045504
        %v639 = vrot.slane %v188, 2
        %v640 = vrot.slane %v189, 2
        %v641 = vsel %vm638, %v639, %v640
        %v642 = vrot.slane %v190, 2
        %v643 = vsel %vm638, %v640, %v642
        %v644 = vrot.slane %v191, 2
        %v645 = vrot.slane %v192, 2
        %v646 = vsel %vm638, %v644, %v645
        %v647 = vrot.slane %v193, 2
        %v648 = vsel %vm638, %v645, %v647
        %v649 = vrot.slane %v194, 2
        %v650 = vrot.slane %v195, 2
        %v651 = vsel %vm638, %v649, %v650
        %v652 = vrot.slane %v196, 2
        %v653 = vsel %vm638, %v650, %v652
        %v654 = vrot.slane %v197, 2
        %v655 = vrot.slane %v198, 2
        %v656 = vsel %vm638, %v654, %v655
        %v657 = vrot.slane %v199, 2
        %v658 = vsel %vm638, %v655, %v657
        %v659 = vrot.slane %v200, 2
        %v660 = vrot.slane %v201, 2
        %v661 = vsel %vm638, %v659, %v660
        %v662 = vrot.slane %v202, 2
        %v663 = vsel %vm638, %v660, %v662
        %v664 = vrot.slane %v203, 2
        %v665 = vrot.slane %v204, 2
        %v666 = vsel %vm638, %v664, %v665
        %v667 = vrot.slane %v205, 2
        %v668 = vsel %vm638, %v665, %v667
        %v669 = vrot.slane %v206, 2
        %v670 = vrot.slane %v207, 2
        %v671 = vsel %vm638, %v669, %v670
        %v672 = vrot.slane %v208, 2
        %v673 = vsel %vm638, %v670, %v672
        %v674 = vrot.slane %v209, 2
        %v675 = vrot.slane %v210, 2
        %v676 = vsel %vm638, %v674, %v675
        %v677 = vrot.slane %v211, 2
        %v678 = vsel %vm638, %v675, %v677
        %v695 = vpack.c.bf16 %v643, %v641
        %v696 = vpack.c.bf16 %v648, %v646
        %v697 = vpack.c.bf16 %v653, %v651
        %v698 = vpack.c.bf16 %v658, %v656
        %v699 = vpack.c.bf16 %v663, %v661
        %v700 = vpack.c.bf16 %v668, %v666
        %v701 = vpack.c.bf16 %v673, %v671
        %v702 = vpack.c.bf16 %v678, %v676
        %s703 = scalar_lea.vmem %s1, 128
        %v704 = vld [vmem:[%s703] sm:$0xf]
        %v705 = vld [vmem:[%s703 + $0x4] sm:$0xf]
        %v706 = vld [vmem:[%s703 + $0x8] sm:$0xf]
        %v707 = vld [vmem:[%s703 + $0xc] sm:$0xf]
        %v708 = vld [vmem:[%s703 + $0x10] sm:$0xf]
        %v709 = vld [vmem:[%s703 + $0x14] sm:$0xf]
        %v710 = vld [vmem:[%s703 + $0x18] sm:$0xf]
        %v711 = vld [vmem:[%s703 + $0x1c] sm:$0xf]
        %v712 = vld [vmem:[%s703 + $0x20] sm:$0xf]
        %v713 = vld [vmem:[%s703 + $0x24] sm:$0xf]
        %v714 = vld [vmem:[%s703 + $0x28] sm:$0xf]
        %v715 = vld [vmem:[%s703 + $0x2c] sm:$0xf]
        %v716 = vld [vmem:[%s703 + $0x30] sm:$0xf]
        %v717 = vld [vmem:[%s703 + $0x34] sm:$0xf]
        %v718 = vld [vmem:[%s703 + $0x38] sm:$0xf]
        %v719 = vld [vmem:[%s703 + $0x3c] sm:$0xf]
        %v736 = vunpack.c.l.b16 %v704
        %v737 = vunpack.c.l.b16 %v705
        %v738 = vunpack.c.l.b16 %v706
        %v739 = vunpack.c.l.b16 %v707
        %v740 = vunpack.c.l.b16 %v708
        %v741 = vunpack.c.l.b16 %v709
        %v742 = vunpack.c.l.b16 %v710
        %v743 = vunpack.c.l.b16 %v711
        %v744 = vunpack.c.l.b16 %v712
        %v745 = vunpack.c.l.b16 %v713
        %v746 = vunpack.c.l.b16 %v714
        %v747 = vunpack.c.l.b16 %v715
        %v748 = vunpack.c.l.b16 %v716
        %v749 = vunpack.c.l.b16 %v717
        %v750 = vunpack.c.l.b16 %v718
        %v751 = vunpack.c.l.b16 %v719
        %v752 = vpack.c.b16 %v737, %v736
        %v753 = vpack.c.b16 %v739, %v738
        %v754 = vpack.c.b16 %v741, %v740
        %v755 = vpack.c.b16 %v743, %v742
        %v756 = vpack.c.b16 %v745, %v744
        %v757 = vpack.c.b16 %v747, %v746
        %v758 = vpack.c.b16 %v749, %v748
        %v759 = vpack.c.b16 %v751, %v750
        %768 = vmatprep.subr.bf16.mxu0 0
        %769 = vmatpush1.bf16.msra.mxu0 %v752
        %770 = vmatprep.subr.bf16.mxu0 0
        %771 = vmatpush1.bf16.msra.mxu0 %v753
        %772 = vmatprep.subr.bf16.mxu0 0
        %773 = vmatpush1.bf16.msra.mxu0 %v754
        %774 = vmatprep.subr.bf16.mxu0 0
        %775 = vmatpush1.bf16.msra.mxu0 %v755
        %776 = vmatprep.subr.bf16.mxu0 0
        %777 = vmatpush1.bf16.msra.mxu0 %v756
        %778 = vmatprep.subr.bf16.mxu0 0
        %779 = vmatpush1.bf16.msra.mxu0 %v757
        %780 = vmatprep.subr.bf16.mxu0 0
        %781 = vmatpush1.bf16.msra.mxu0 %v758
        %782 = vmatprep.subr.bf16.mxu0 0
        %783 = vmatpush1.bf16.msra.mxu0 %v759
        %784 = vmatprep.subr.bf16.mxu0 0
        %785 = vmatpush1.bf16.msra.mxu0 0
        %786 = vmatprep.subr.bf16.mxu0 0
        %787 = vmatpush1.bf16.msra.mxu0 0
        %788 = vmatprep.subr.bf16.mxu0 0
        %789 = vmatpush1.bf16.msra.mxu0 0
        %790 = vmatprep.subr.bf16.mxu0 0
        %791 = vmatpush1.bf16.msra.mxu0 0
        %792 = vmatprep.subr.bf16.mxu0 0
        %793 = vmatpush1.bf16.msra.mxu0 0
        %794 = vmatprep.subr.bf16.mxu0 0
        %795 = vmatpush1.bf16.msra.mxu0 0
        %796 = vmatprep.subr.bf16.mxu0 0
        %797 = vmatpush1.bf16.msra.mxu0 0
        %798 = vmatprep.subr.bf16.mxu0 0
        %799 = vmatpush1.bf16.msra.mxu0 0
        %800 = vmatprep.mubr.bf16.mxu0 0
        %801 = vmatmul.mubr.bf16.gmra.mrb[0].mxu0 %v695
        %v802 = vpop.f32.mrb[0].mxu0
        %v803 = vadd.f32 0.0, %v802
        %v804 = vpop.f32.mrb[0].mxu0
        %v805 = vpop.f32.mrb[0].mxu0
        %v806 = vadd.f32 0.0, %v805
        %v807 = vpop.f32.mrb[0].mxu0
        %808 = vmatprep.mubr.bf16.mxu0 0
        %809 = vmatmul.mubr.bf16.gmra.mrb[0].mxu0 %v696
        %v810 = vpop.f32.mrb[0].mxu0
        %v811 = vadd.f32 0.0, %v810
        %v812 = vpop.f32.mrb[0].mxu0
        %v813 = vpop.f32.mrb[0].mxu0
        %v814 = vadd.f32 0.0, %v813
        %v815 = vpop.f32.mrb[0].mxu0
        %816 = vmatprep.mubr.bf16.mxu0 0
        %817 = vmatmul.mubr.bf16.gmra.mrb[0].mxu0 %v697
        %v818 = vpop.f32.mrb[0].mxu0
        %v819 = vadd.f32 0.0, %v818
        %v820 = vpop.f32.mrb[0].mxu0
        %v821 = vpop.f32.mrb[0].mxu0
        %v822 = vadd.f32 0.0, %v821
        %v823 = vpop.f32.mrb[0].mxu0
        %824 = vmatprep.mubr.bf16.mxu0 0
        %825 = vmatmul.mubr.bf16.gmra.mrb[0].mxu0 %v698
        %v826 = vpop.f32.mrb[0].mxu0
        %v827 = vadd.f32 0.0, %v826
        %v828 = vpop.f32.mrb[0].mxu0
        %v829 = vpop.f32.mrb[0].mxu0
        %v830 = vadd.f32 0.0, %v829
        %v831 = vpop.f32.mrb[0].mxu0
        %832 = vmatprep.mubr.bf16.mxu0 0
        %833 = vmatmul.mubr.bf16.gmra.mrb[0].mxu0 %v699
        %v834 = vpop.f32.mrb[0].mxu0
        %v835 = vadd.f32 0.0, %v834
        %v836 = vpop.f32.mrb[0].mxu0
        %v837 = vpop.f32.mrb[0].mxu0
        %v838 = vadd.f32 0.0, %v837
        %v839 = vpop.f32.mrb[0].mxu0
        %840 = vmatprep.mubr.bf16.mxu0 0
        %841 = vmatmul.mubr.bf16.gmra.mrb[0].mxu0 %v700
        %v842 = vpop.f32.mrb[0].mxu0
        %v843 = vadd.f32 0.0, %v842
        %v844 = vpop.f32.mrb[0].mxu0
        %v845 = vpop.f32.mrb[0].mxu0
        %v846 = vadd.f32 0.0, %v845
        %v847 = vpop.f32.mrb[0].mxu0
        %848 = vmatprep.mubr.bf16.mxu0 0
        %849 = vmatmul.mubr.bf16.gmra.mrb[0].mxu0 %v701
        %v850 = vpop.f32.mrb[0].mxu0
        %v851 = vadd.f32 0.0, %v850
        %v852 = vpop.f32.mrb[0].mxu0
        %v853 = vpop.f32.mrb[0].mxu0
        %v854 = vadd.f32 0.0, %v853
        %v855 = vpop.f32.mrb[0].mxu0
        %856 = vmatprep.mubr.bf16.mxu0 0
        %857 = vmatmul.mubr.bf16.gmra.mrb[0].mxu0 %v702
        %v858 = vpop.f32.mrb[0].mxu0
        %v859 = vadd.f32 0.0, %v858
        %v860 = vpop.f32.mrb[0].mxu0
        %v861 = vpop.f32.mrb[0].mxu0
        %v862 = vadd.f32 0.0, %v861
        %v863 = vpop.f32.mrb[0].mxu0
        %864 = vdwg.mxu0
        %v865 = vadd.f32 %v576, %v803
        %v866 = vadd.f32 %v579, %v806
        %v867 = vadd.f32 %v584, %v811
        %v868 = vadd.f32 %v587, %v814
        %v869 = vadd.f32 %v592, %v819
        %v870 = vadd.f32 %v595, %v822
        %v871 = vadd.f32 %v600, %v827
        %v872 = vadd.f32 %v603, %v830
        %v873 = vadd.f32 %v608, %v835
        %v874 = vadd.f32 %v611, %v838
        %v875 = vadd.f32 %v616, %v843
        %v876 = vadd.f32 %v619, %v846
        %v877 = vadd.f32 %v624, %v851
        %v878 = vadd.f32 %v627, %v854
        %v879 = vadd.f32 %v632, %v859
        %v880 = vadd.f32 %v635, %v862
        %v881 = vpack.c.bf16 %v213, %v212
        %s882 = scalar_lea.vmem %s1, 192
        %v883 = vld [vmem:[%s882] sm:$0xf]
        %v884 = vld [vmem:[%s882 + $0x4] sm:$0xf]
        %v885 = vld [vmem:[%s882 + $0x8] sm:$0xf]
        %v886 = vld [vmem:[%s882 + $0xc] sm:$0xf]
        %v887 = vld [vmem:[%s882 + $0x10] sm:$0xf]
        %v888 = vld [vmem:[%s882 + $0x14] sm:$0xf]
        %v889 = vld [vmem:[%s882 + $0x18] sm:$0xf]
        %v890 = vld [vmem:[%s882 + $0x1c] sm:$0xf]
        %v891 = vld [vmem:[%s882 + $0x20] sm:$0xf]
        %v892 = vld [vmem:[%s882 + $0x24] sm:$0xf]
        %v893 = vld [vmem:[%s882 + $0x28] sm:$0xf]
        %v894 = vld [vmem:[%s882 + $0x2c] sm:$0xf]
        %v895 = vld [vmem:[%s882 + $0x30] sm:$0xf]
        %v896 = vld [vmem:[%s882 + $0x34] sm:$0xf]
        %v897 = vld [vmem:[%s882 + $0x38] sm:$0xf]
        %v898 = vld [vmem:[%s882 + $0x3c] sm:$0xf]
        %v915 = vunpack.c.l.b16 %v883
        %v916 = vunpack.c.l.b16 %v884
        %v917 = vunpack.c.l.b16 %v885
        %v918 = vunpack.c.l.b16 %v886
        %v919 = vunpack.c.l.b16 %v887
        %v920 = vunpack.c.l.b16 %v888
        %v921 = vunpack.c.l.b16 %v889
        %v922 = vunpack.c.l.b16 %v890
        %v923 = vunpack.c.l.b16 %v891
        %v924 = vunpack.c.l.b16 %v892
        %v925 = vunpack.c.l.b16 %v893
        %v926 = vunpack.c.l.b16 %v894
        %v927 = vunpack.c.l.b16 %v895
        %v928 = vunpack.c.l.b16 %v896
        %v929 = vunpack.c.l.b16 %v897
        %v930 = vunpack.c.l.b16 %v898
        %v931 = vpack.c.b16 %v916, %v915
        %v932 = vpack.c.b16 %v918, %v917
        %v933 = vpack.c.b16 %v920, %v919
        %v934 = vpack.c.b16 %v922, %v921
        %v935 = vpack.c.b16 %v924, %v923
        %v936 = vpack.c.b16 %v926, %v925
        %v937 = vpack.c.b16 %v928, %v927
        %v938 = vpack.c.b16 %v930, %v929
        %947 = vmatprep.subr.bf16.mxu0 0
        %948 = vmatpush1.bf16.msra.mxu0 %v931
        %949 = vmatprep.subr.bf16.mxu0 0
        %950 = vmatpush1.bf16.msra.mxu0 %v932
        %951 = vmatprep.subr.bf16.mxu0 0
        %952 = vmatpush1.bf16.msra.mxu0 %v933
        %953 = vmatprep.subr.bf16.mxu0 0
        %954 = vmatpush1.bf16.msra.mxu0 %v934
        %955 = vmatprep.subr.bf16.mxu0 0
        %956 = vmatpush1.bf16.msra.mxu0 %v935
        %957 = vmatprep.subr.bf16.mxu0 0
        %958 = vmatpush1.bf16.msra.mxu0 %v936
        %959 = vmatprep.subr.bf16.mxu0 0
        %960 = vmatpush1.bf16.msra.mxu0 %v937
        %961 = vmatprep.subr.bf16.mxu0 0
        %962 = vmatpush1.bf16.msra.mxu0 %v938
        %963 = vmatprep.subr.bf16.mxu0 0
        %964 = vmatpush1.bf16.msra.mxu0 0
        %965 = vmatprep.subr.bf16.mxu0 0
        %966 = vmatpush1.bf16.msra.mxu0 0
        %967 = vmatprep.subr.bf16.mxu0 0
        %968 = vmatpush1.bf16.msra.mxu0 0
        %969 = vmatprep.subr.bf16.mxu0 0
        %970 = vmatpush1.bf16.msra.mxu0 0
        %971 = vmatprep.subr.bf16.mxu0 0
        %972 = vmatpush1.bf16.msra.mxu0 0
        %973 = vmatprep.subr.bf16.mxu0 0
        %974 = vmatpush1.bf16.msra.mxu0 0
        %975 = vmatprep.subr.bf16.mxu0 0
        %976 = vmatpush1.bf16.msra.mxu0 0
        %977 = vmatprep.subr.bf16.mxu0 0
        %978 = vmatpush1.bf16.msra.mxu0 0
        %979 = vmatprep.mubr.bf16.mxu0 0
        %980 = vmatmul.mubr.bf16.gmra.mrb[0].mxu0 %v219
        %v981 = vpop.f32.mrb[0].mxu0
        %v982 = vadd.f32 0.0, %v981
        %v983 = vpop.f32.mrb[0].mxu0
        %v984 = vpop.f32.mrb[0].mxu0
        %v985 = vadd.f32 0.0, %v984
        %v986 = vpop.f32.mrb[0].mxu0
        %987 = vmatprep.mubr.bf16.mxu0 0
        %988 = vmatmul.mubr.bf16.gmra.mrb[0].mxu0 %v220
        %v989 = vpop.f32.mrb[0].mxu0
        %v990 = vadd.f32 0.0, %v989
        %v991 = vpop.f32.mrb[0].mxu0
        %v992 = vpop.f32.mrb[0].mxu0
        %v993 = vadd.f32 0.0, %v992
        %v994 = vpop.f32.mrb[0].mxu0
        %995 = vmatprep.mubr.bf16.mxu0 0
        %996 = vmatmul.mubr.bf16.gmra.mrb[0].mxu0 %v221
        %v997 = vpop.f32.mrb[0].mxu0
        %v998 = vadd.f32 0.0, %v997
        %v999 = vpop.f32.mrb[0].mxu0
        %v1000 = vpop.f32.mrb[0].mxu0
        %v1001 = vadd.f32 0.0, %v1000
        %v1002 = vpop.f32.mrb[0].mxu0
        %1003 = vmatprep.mubr.bf16.mxu0 0
        %1004 = vmatmul.mubr.bf16.gmra.mrb[0].mxu0 %v222
        %v1005 = vpop.f32.mrb[0].mxu0
        %v1006 = vadd.f32 0.0, %v1005
        %v1007 = vpop.f32.mrb[0].mxu0
        %v1008 = vpop.f32.mrb[0].mxu0
        %v1009 = vadd.f32 0.0, %v1008
        %v1010 = vpop.f32.mrb[0].mxu0
        %1011 = vmatprep.mubr.bf16.mxu0 0
        %1012 = vmatmul.mubr.bf16.gmra.mrb[0].mxu0 %v223
        %v1013 = vpop.f32.mrb[0].mxu0
        %v1014 = vadd.f32 0.0, %v1013
        %v1015 = vpop.f32.mrb[0].mxu0
        %v1016 = vpop.f32.mrb[0].mxu0
        %v1017 = vadd.f32 0.0, %v1016
        %v1018 = vpop.f32.mrb[0].mxu0
        %1019 = vmatprep.mubr.bf16.mxu0 0
        %1020 = vmatmul.mubr.bf16.gmra.mrb[0].mxu0 %v224
        %v1021 = vpop.f32.mrb[0].mxu0
        %v1022 = vadd.f32 0.0, %v1021
        %v1023 = vpop.f32.mrb[0].mxu0
        %v1024 = vpop.f32.mrb[0].mxu0
        %v1025 = vadd.f32 0.0, %v1024
        %v1026 = vpop.f32.mrb[0].mxu0
        %1027 = vmatprep.mubr.bf16.mxu0 0
        %1028 = vmatmul.mubr.bf16.gmra.mrb[0].mxu0 %v225
        %v1029 = vpop.f32.mrb[0].mxu0
        %v1030 = vadd.f32 0.0, %v1029
        %v1031 = vpop.f32.mrb[0].mxu0
        %v1032 = vpop.f32.mrb[0].mxu0
        %v1033 = vadd.f32 0.0, %v1032
        %v1034 = vpop.f32.mrb[0].mxu0
        %1035 = vmatprep.mubr.bf16.mxu0 0
        %1036 = vmatmul.mubr.bf16.gmra.mrb[0].mxu0 %v881
        %v1037 = vpop.f32.mrb[0].mxu0
        %v1038 = vadd.f32 0.0, %v1037
        %v1039 = vpop.f32.mrb[0].mxu0
        %v1040 = vpop.f32.mrb[0].mxu0
        %v1041 = vadd.f32 0.0, %v1040
        %v1042 = vpop.f32.mrb[0].mxu0
        %1043 = vdwg.mxu0
        %v1044 = vadd.f32 %v865, %v982
        %v1045 = vadd.f32 %v866, %v985
        %v1046 = vadd.f32 %v867, %v990
        %v1047 = vadd.f32 %v868, %v993
        %v1048 = vadd.f32 %v869, %v998
        %v1049 = vadd.f32 %v870, %v1001
        %v1050 = vadd.f32 %v871, %v1006
        %v1051 = vadd.f32 %v872, %v1009
        %v1052 = vadd.f32 %v873, %v1014
        %v1053 = vadd.f32 %v874, %v1017
        %v1054 = vadd.f32 %v875, %v1022
        %v1055 = vadd.f32 %v876, %v1025
        %v1056 = vadd.f32 %v877, %v1030
        %v1057 = vadd.f32 %v878, %v1033
        %v1058 = vadd.f32 %v879, %v1038
        %v1059 = vadd.f32 %v880, %v1041
        %v1063 = vrot.slane %v212, 1
        %v1064 = vrot.slane %v213, 1
        %v1065 = vsel %vm266, %v1063, %v1064
        %v1066 = vrot.slane %v214, 1
        %v1067 = vsel %vm266, %v1064, %v1066
        %v1070 = vpack.c.bf16 %v1067, %v1065
        %s1071 = scalar_lea.vmem %s1, 256
        %v1072 = vld [vmem:[%s1071] sm:$0xf]
        %v1073 = vld [vmem:[%s1071 + $0x4] sm:$0xf]
        %v1074 = vld [vmem:[%s1071 + $0x8] sm:$0xf]
        %v1075 = vld [vmem:[%s1071 + $0xc] sm:$0xf]
        %v1076 = vld [vmem:[%s1071 + $0x10] sm:$0xf]
        %v1077 = vld [vmem:[%s1071 + $0x14] sm:$0xf]
        %v1078 = vld [vmem:[%s1071 + $0x18] sm:$0xf]
        %v1079 = vld [vmem:[%s1071 + $0x1c] sm:$0xf]
        %v1080 = vld [vmem:[%s1071 + $0x20] sm:$0xf]
        %v1081 = vld [vmem:[%s1071 + $0x24] sm:$0xf]
        %v1082 = vld [vmem:[%s1071 + $0x28] sm:$0xf]
        %v1083 = vld [vmem:[%s1071 + $0x2c] sm:$0xf]
        %v1084 = vld [vmem:[%s1071 + $0x30] sm:$0xf]
        %v1085 = vld [vmem:[%s1071 + $0x34] sm:$0xf]
        %v1086 = vld [vmem:[%s1071 + $0x38] sm:$0xf]
        %v1087 = vld [vmem:[%s1071 + $0x3c] sm:$0xf]
        %v1104 = vunpack.c.l.b16 %v1072
        %v1105 = vunpack.c.l.b16 %v1073
        %v1106 = vunpack.c.l.b16 %v1074
        %v1107 = vunpack.c.l.b16 %v1075
        %v1108 = vunpack.c.l.b16 %v1076
        %v1109 = vunpack.c.l.b16 %v1077
        %v1110 = vunpack.c.l.b16 %v1078
        %v1111 = vunpack.c.l.b16 %v1079
        %v1112 = vunpack.c.l.b16 %v1080
        %v1113 = vunpack.c.l.b16 %v1081
        %v1114 = vunpack.c.l.b16 %v1082
        %v1115 = vunpack.c.l.b16 %v1083
        %v1116 = vunpack.c.l.b16 %v1084
        %v1117 = vunpack.c.l.b16 %v1085
        %v1118 = vunpack.c.l.b16 %v1086
        %v1119 = vunpack.c.l.b16 %v1087
        %v1120 = vpack.c.b16 %v1105, %v1104
        %v1121 = vpack.c.b16 %v1107, %v1106
        %v1122 = vpack.c.b16 %v1109, %v1108
        %v1123 = vpack.c.b16 %v1111, %v1110
        %v1124 = vpack.c.b16 %v1113, %v1112
        %v1125 = vpack.c.b16 %v1115, %v1114
        %v1126 = vpack.c.b16 %v1117, %v1116
        %v1127 = vpack.c.b16 %v1119, %v1118
        %1136 = vmatprep.subr.bf16.mxu0 0
        %1137 = vmatpush1.bf16.msra.mxu0 %v1120
        %1138 = vmatprep.subr.bf16.mxu0 0
        %1139 = vmatpush1.bf16.msra.mxu0 %v1121
        %1140 = vmatprep.subr.bf16.mxu0 0
        %1141 = vmatpush1.bf16.msra.mxu0 %v1122
        %1142 = vmatprep.subr.bf16.mxu0 0
        %1143 = vmatpush1.bf16.msra.mxu0 %v1123
        %1144 = vmatprep.subr.bf16.mxu0 0
        %1145 = vmatpush1.bf16.msra.mxu0 %v1124
        %1146 = vmatprep.subr.bf16.mxu0 0
        %1147 = vmatpush1.bf16.msra.mxu0 %v1125
        %1148 = vmatprep.subr.bf16.mxu0 0
        %1149 = vmatpush1.bf16.msra.mxu0 %v1126
        %1150 = vmatprep.subr.bf16.mxu0 0
        %1151 = vmatpush1.bf16.msra.mxu0 %v1127
        %1152 = vmatprep.subr.bf16.mxu0 0
        %1153 = vmatpush1.bf16.msra.mxu0 0
        %1154 = vmatprep.subr.bf16.mxu0 0
        %1155 = vmatpush1.bf16.msra.mxu0 0
        %1156 = vmatprep.subr.bf16.mxu0 0
        %1157 = vmatpush1.bf16.msra.mxu0 0
        %1158 = vmatprep.subr.bf16.mxu0 0
        %1159 = vmatpush1.bf16.msra.mxu0 0
        %1160 = vmatprep.subr.bf16.mxu0 0
        %1161 = vmatpush1.bf16.msra.mxu0 0
        %1162 = vmatprep.subr.bf16.mxu0 0
        %1163 = vmatpush1.bf16.msra.mxu0 0
        %1164 = vmatprep.subr.bf16.mxu0 0
        %1165 = vmatpush1.bf16.msra.mxu0 0
        %1166 = vmatprep.subr.bf16.mxu0 0
        %1167 = vmatpush1.bf16.msra.mxu0 0
        %1168 = vmatprep.mubr.bf16.mxu0 0
        %1169 = vmatmul.mubr.bf16.gmra.mrb[0].mxu0 %v324
        %v1170 = vpop.f32.mrb[0].mxu0
        %v1171 = vadd.f32 0.0, %v1170
        %v1172 = vpop.f32.mrb[0].mxu0
        %v1173 = vpop.f32.mrb[0].mxu0
        %v1174 = vadd.f32 0.0, %v1173
        %v1175 = vpop.f32.mrb[0].mxu0
        %1176 = vmatprep.mubr.bf16.mxu0 0
        %1177 = vmatmul.mubr.bf16.gmra.mrb[0].mxu0 %v325
        %v1178 = vpop.f32.mrb[0].mxu0
        %v1179 = vadd.f32 0.0, %v1178
        %v1180 = vpop.f32.mrb[0].mxu0
        %v1181 = vpop.f32.mrb[0].mxu0
        %v1182 = vadd.f32 0.0, %v1181
        %v1183 = vpop.f32.mrb[0].mxu0
        %1184 = vmatprep.mubr.bf16.mxu0 0
        %1185 = vmatmul.mubr.bf16.gmra.mrb[0].mxu0 %v326
        %v1186 = vpop.f32.mrb[0].mxu0
        %v1187 = vadd.f32 0.0, %v1186
        %v1188 = vpop.f32.mrb[0].mxu0
        %v1189 = vpop.f32.mrb[0].mxu0
        %v1190 = vadd.f32 0.0, %v1189
        %v1191 = vpop.f32.mrb[0].mxu0
        %1192 = vmatprep.mubr.bf16.mxu0 0
        %1193 = vmatmul.mubr.bf16.gmra.mrb[0].mxu0 %v327
        %v1194 = vpop.f32.mrb[0].mxu0
        %v1195 = vadd.f32 0.0, %v1194
        %v1196 = vpop.f32.mrb[0].mxu0
        %v1197 = vpop.f32.mrb[0].mxu0
        %v1198 = vadd.f32 0.0, %v1197
        %v1199 = vpop.f32.mrb[0].mxu0
        %1200 = vmatprep.mubr.bf16.mxu0 0
        %1201 = vmatmul.mubr.bf16.gmra.mrb[0].mxu0 %v328
        %v1202 = vpop.f32.mrb[0].mxu0
        %v1203 = vadd.f32 0.0, %v1202
        %v1204 = vpop.f32.mrb[0].mxu0
        %v1205 = vpop.f32.mrb[0].mxu0
        %v1206 = vadd.f32 0.0, %v1205
        %v1207 = vpop.f32.mrb[0].mxu0
        %1208 = vmatprep.mubr.bf16.mxu0 0
        %1209 = vmatmul.mubr.bf16.gmra.mrb[0].mxu0 %v329
        %v1210 = vpop.f32.mrb[0].mxu0
        %v1211 = vadd.f32 0.0, %v1210
        %v1212 = vpop.f32.mrb[0].mxu0
        %v1213 = vpop.f32.mrb[0].mxu0
        %v1214 = vadd.f32 0.0, %v1213
        %v1215 = vpop.f32.mrb[0].mxu0
        %1216 = vmatprep.mubr.bf16.mxu0 0
        %1217 = vmatmul.mubr.bf16.gmra.mrb[0].mxu0 %v330
        %v1218 = vpop.f32.mrb[0].mxu0
        %v1219 = vadd.f32 0.0, %v1218
        %v1220 = vpop.f32.mrb[0].mxu0
        %v1221 = vpop.f32.mrb[0].mxu0
        %v1222 = vadd.f32 0.0, %v1221
        %v1223 = vpop.f32.mrb[0].mxu0
        %1224 = vmatprep.mubr.bf16.mxu0 0
        %1225 = vmatmul.mubr.bf16.gmra.mrb[0].mxu0 %v1070
        %v1226 = vpop.f32.mrb[0].mxu0
        %v1227 = vadd.f32 0.0, %v1226
        %v1228 = vpop.f32.mrb[0].mxu0
        %v1229 = vpop.f32.mrb[0].mxu0
        %v1230 = vadd.f32 0.0, %v1229
        %v1231 = vpop.f32.mrb[0].mxu0
        %1232 = vdwg.mxu0
        %v1233 = vadd.f32 %v1044, %v1171
        %v1234 = vadd.f32 %v1045, %v1174
        %v1235 = vadd.f32 %v1046, %v1179
        %v1236 = vadd.f32 %v1047, %v1182
        %v1237 = vadd.f32 %v1048, %v1187
        %v1238 = vadd.f32 %v1049, %v1190
        %v1239 = vadd.f32 %v1050, %v1195
        %v1240 = vadd.f32 %v1051, %v1198
        %v1241 = vadd.f32 %v1052, %v1203
        %v1242 = vadd.f32 %v1053, %v1206
        %v1243 = vadd.f32 %v1054, %v1211
        %v1244 = vadd.f32 %v1055, %v1214
        %v1245 = vadd.f32 %v1056, %v1219
        %v1246 = vadd.f32 %v1057, %v1222
        %v1247 = vadd.f32 %v1058, %v1227
        %v1248 = vadd.f32 %v1059, %v1230
        %v1249 = vrot.slane %v212, 2
        %v1250 = vrot.slane %v213, 2
        %v1251 = vsel %vm638, %v1249, %v1250
        %v1252 = vrot.slane %v214, 2
        %v1253 = vsel %vm638, %v1250, %v1252
        %v1256 = vpack.c.bf16 %v1253, %v1251
        %s1257 = scalar_lea.vmem %s1, 320
        %v1258 = vld [vmem:[%s1257] sm:$0xf]
        %v1259 = vld [vmem:[%s1257 + $0x4] sm:$0xf]
        %v1260 = vld [vmem:[%s1257 + $0x8] sm:$0xf]
        %v1261 = vld [vmem:[%s1257 + $0xc] sm:$0xf]
        %v1262 = vld [vmem:[%s1257 + $0x10] sm:$0xf]
        %v1263 = vld [vmem:[%s1257 + $0x14] sm:$0xf]
        %v1264 = vld [vmem:[%s1257 + $0x18] sm:$0xf]
        %v1265 = vld [vmem:[%s1257 + $0x1c] sm:$0xf]
        %v1266 = vld [vmem:[%s1257 + $0x20] sm:$0xf]
        %v1267 = vld [vmem:[%s1257 + $0x24] sm:$0xf]
        %v1268 = vld [vmem:[%s1257 + $0x28] sm:$0xf]
        %v1269 = vld [vmem:[%s1257 + $0x2c] sm:$0xf]
        %v1270 = vld [vmem:[%s1257 + $0x30] sm:$0xf]
        %v1271 = vld [vmem:[%s1257 + $0x34] sm:$0xf]
        %v1272 = vld [vmem:[%s1257 + $0x38] sm:$0xf]
        %v1273 = vld [vmem:[%s1257 + $0x3c] sm:$0xf]
        %v1290 = vunpack.c.l.b16 %v1258
        %v1291 = vunpack.c.l.b16 %v1259
        %v1292 = vunpack.c.l.b16 %v1260
        %v1293 = vunpack.c.l.b16 %v1261
        %v1294 = vunpack.c.l.b16 %v1262
        %v1295 = vunpack.c.l.b16 %v1263
        %v1296 = vunpack.c.l.b16 %v1264
        %v1297 = vunpack.c.l.b16 %v1265
        %v1298 = vunpack.c.l.b16 %v1266
        %v1299 = vunpack.c.l.b16 %v1267
        %v1300 = vunpack.c.l.b16 %v1268
        %v1301 = vunpack.c.l.b16 %v1269
        %v1302 = vunpack.c.l.b16 %v1270
        %v1303 = vunpack.c.l.b16 %v1271
        %v1304 = vunpack.c.l.b16 %v1272
        %v1305 = vunpack.c.l.b16 %v1273
        %v1306 = vpack.c.b16 %v1291, %v1290
        %v1307 = vpack.c.b16 %v1293, %v1292
        %v1308 = vpack.c.b16 %v1295, %v1294
        %v1309 = vpack.c.b16 %v1297, %v1296
        %v1310 = vpack.c.b16 %v1299, %v1298
        %v1311 = vpack.c.b16 %v1301, %v1300
        %v1312 = vpack.c.b16 %v1303, %v1302
        %v1313 = vpack.c.b16 %v1305, %v1304
        %1322 = vmatprep.subr.bf16.mxu0 0
        %1323 = vmatpush1.bf16.msra.mxu0 %v1306
        %1324 = vmatprep.subr.bf16.mxu0 0
        %1325 = vmatpush1.bf16.msra.mxu0 %v1307
        %1326 = vmatprep.subr.bf16.mxu0 0
        %1327 = vmatpush1.bf16.msra.mxu0 %v1308
        %1328 = vmatprep.subr.bf16.mxu0 0
        %1329 = vmatpush1.bf16.msra.mxu0 %v1309
        %1330 = vmatprep.subr.bf16.mxu0 0
        %1331 = vmatpush1.bf16.msra.mxu0 %v1310
        %1332 = vmatprep.subr.bf16.mxu0 0
        %1333 = vmatpush1.bf16.msra.mxu0 %v1311
        %1334 = vmatprep.subr.bf16.mxu0 0
        %1335 = vmatpush1.bf16.msra.mxu0 %v1312
        %1336 = vmatprep.subr.bf16.mxu0 0
        %1337 = vmatpush1.bf16.msra.mxu0 %v1313
        %1338 = vmatprep.subr.bf16.mxu0 0
        %1339 = vmatpush1.bf16.msra.mxu0 0
        %1340 = vmatprep.subr.bf16.mxu0 0
        %1341 = vmatpush1.bf16.msra.mxu0 0
        %1342 = vmatprep.subr.bf16.mxu0 0
        %1343 = vmatpush1.bf16.msra.mxu0 0
        %1344 = vmatprep.subr.bf16.mxu0 0
        %1345 = vmatpush1.bf16.msra.mxu0 0
        %1346 = vmatprep.subr.bf16.mxu0 0
        %1347 = vmatpush1.bf16.msra.mxu0 0
        %1348 = vmatprep.subr.bf16.mxu0 0
        %1349 = vmatpush1.bf16.msra.mxu0 0
        %1350 = vmatprep.subr.bf16.mxu0 0
        %1351 = vmatpush1.bf16.msra.mxu0 0
        %1352 = vmatprep.subr.bf16.mxu0 0
        %1353 = vmatpush1.bf16.msra.mxu0 0
        %1354 = vmatprep.mubr.bf16.mxu0 0
        %1355 = vmatmul.mubr.bf16.gmra.mrb[0].mxu0 %v696
        %v1356 = vpop.f32.mrb[0].mxu0
        %v1357 = vadd.f32 0.0, %v1356
        %v1358 = vpop.f32.mrb[0].mxu0
        %v1359 = vpop.f32.mrb[0].mxu0
        %v1360 = vadd.f32 0.0, %v1359
        %v1361 = vpop.f32.mrb[0].mxu0
        %1362 = vmatprep.mubr.bf16.mxu0 0
        %1363 = vmatmul.mubr.bf16.gmra.mrb[0].mxu0 %v697
        %v1364 = vpop.f32.mrb[0].mxu0
        %v1365 = vadd.f32 0.0, %v1364
        %v1366 = vpop.f32.mrb[0].mxu0
        %v1367 = vpop.f32.mrb[0].mxu0
        %v1368 = vadd.f32 0.0, %v1367
        %v1369 = vpop.f32.mrb[0].mxu0
        %1370 = vmatprep.mubr.bf16.mxu0 0
        %1371 = vmatmul.mubr.bf16.gmra.mrb[0].mxu0 %v698
        %v1372 = vpop.f32.mrb[0].mxu0
        %v1373 = vadd.f32 0.0, %v1372
        %v1374 = vpop.f32.mrb[0].mxu0
        %v1375 = vpop.f32.mrb[0].mxu0
        %v1376 = vadd.f32 0.0, %v1375
        %v1377 = vpop.f32.mrb[0].mxu0
        %1378 = vmatprep.mubr.bf16.mxu0 0
        %1379 = vmatmul.mubr.bf16.gmra.mrb[0].mxu0 %v699
        %v1380 = vpop.f32.mrb[0].mxu0
        %v1381 = vadd.f32 0.0, %v1380
        %v1382 = vpop.f32.mrb[0].mxu0
        %v1383 = vpop.f32.mrb[0].mxu0
        %v1384 = vadd.f32 0.0, %v1383
        %v1385 = vpop.f32.mrb[0].mxu0
        %1386 = vmatprep.mubr.bf16.mxu0 0
        %1387 = vmatmul.mubr.bf16.gmra.mrb[0].mxu0 %v700
        %v1388 = vpop.f32.mrb[0].mxu0
        %v1389 = vadd.f32 0.0, %v1388
        %v1390 = vpop.f32.mrb[0].mxu0
        %v1391 = vpop.f32.mrb[0].mxu0
        %v1392 = vadd.f32 0.0, %v1391
        %v1393 = vpop.f32.mrb[0].mxu0
        %1394 = vmatprep.mubr.bf16.mxu0 0
        %1395 = vmatmul.mubr.bf16.gmra.mrb[0].mxu0 %v701
        %v1396 = vpop.f32.mrb[0].mxu0
        %v1397 = vadd.f32 0.0, %v1396
        %v1398 = vpop.f32.mrb[0].mxu0
        %v1399 = vpop.f32.mrb[0].mxu0
        %v1400 = vadd.f32 0.0, %v1399
        %v1401 = vpop.f32.mrb[0].mxu0
        %1402 = vmatprep.mubr.bf16.mxu0 0
        %1403 = vmatmul.mubr.bf16.gmra.mrb[0].mxu0 %v702
        %v1404 = vpop.f32.mrb[0].mxu0
        %v1405 = vadd.f32 0.0, %v1404
        %v1406 = vpop.f32.mrb[0].mxu0
        %v1407 = vpop.f32.mrb[0].mxu0
        %v1408 = vadd.f32 0.0, %v1407
        %v1409 = vpop.f32.mrb[0].mxu0
        %1410 = vmatprep.mubr.bf16.mxu0 0
        %1411 = vmatmul.mubr.bf16.gmra.mrb[0].mxu0 %v1256
        %v1412 = vpop.f32.mrb[0].mxu0
        %v1413 = vadd.f32 0.0, %v1412
        %v1414 = vpop.f32.mrb[0].mxu0
        %v1415 = vpop.f32.mrb[0].mxu0
        %v1416 = vadd.f32 0.0, %v1415
        %v1417 = vpop.f32.mrb[0].mxu0
        %1418 = vdwg.mxu0
        %v1419 = vadd.f32 %v1233, %v1357
        %v1420 = vadd.f32 %v1234, %v1360
        %v1421 = vadd.f32 %v1235, %v1365
        %v1422 = vadd.f32 %v1236, %v1368
        %v1423 = vadd.f32 %v1237, %v1373
        %v1424 = vadd.f32 %v1238, %v1376
        %v1425 = vadd.f32 %v1239, %v1381
        %v1426 = vadd.f32 %v1240, %v1384
        %v1427 = vadd.f32 %v1241, %v1389
        %v1428 = vadd.f32 %v1242, %v1392
        %v1429 = vadd.f32 %v1243, %v1397
        %v1430 = vadd.f32 %v1244, %v1400
        %v1431 = vadd.f32 %v1245, %v1405
        %v1432 = vadd.f32 %v1246, %v1408
        %v1433 = vadd.f32 %v1247, %v1413
        %v1434 = vadd.f32 %v1248, %v1416
        %v1435 = vpack.c.bf16 %v216, %v215
        %s1436 = scalar_lea.vmem %s1, 384
        %v1437 = vld [vmem:[%s1436] sm:$0xf]
        %v1438 = vld [vmem:[%s1436 + $0x4] sm:$0xf]
        %v1439 = vld [vmem:[%s1436 + $0x8] sm:$0xf]
        %v1440 = vld [vmem:[%s1436 + $0xc] sm:$0xf]
        %v1441 = vld [vmem:[%s1436 + $0x10] sm:$0xf]
        %v1442 = vld [vmem:[%s1436 + $0x14] sm:$0xf]
        %v1443 = vld [vmem:[%s1436 + $0x18] sm:$0xf]
        %v1444 = vld [vmem:[%s1436 + $0x1c] sm:$0xf]
        %v1445 = vld [vmem:[%s1436 + $0x20] sm:$0xf]
        %v1446 = vld [vmem:[%s1436 + $0x24] sm:$0xf]
        %v1447 = vld [vmem:[%s1436 + $0x28] sm:$0xf]
        %v1448 = vld [vmem:[%s1436 + $0x2c] sm:$0xf]
        %v1449 = vld [vmem:[%s1436 + $0x30] sm:$0xf]
        %v1450 = vld [vmem:[%s1436 + $0x34] sm:$0xf]
        %v1451 = vld [vmem:[%s1436 + $0x38] sm:$0xf]
        %v1452 = vld [vmem:[%s1436 + $0x3c] sm:$0xf]
        %v1469 = vunpack.c.l.b16 %v1437
        %v1470 = vunpack.c.l.b16 %v1438
        %v1471 = vunpack.c.l.b16 %v1439
        %v1472 = vunpack.c.l.b16 %v1440
        %v1473 = vunpack.c.l.b16 %v1441
        %v1474 = vunpack.c.l.b16 %v1442
        %v1475 = vunpack.c.l.b16 %v1443
        %v1476 = vunpack.c.l.b16 %v1444
        %v1477 = vunpack.c.l.b16 %v1445
        %v1478 = vunpack.c.l.b16 %v1446
        %v1479 = vunpack.c.l.b16 %v1447
        %v1480 = vunpack.c.l.b16 %v1448
        %v1481 = vunpack.c.l.b16 %v1449
        %v1482 = vunpack.c.l.b16 %v1450
        %v1483 = vunpack.c.l.b16 %v1451
        %v1484 = vunpack.c.l.b16 %v1452
        %v1485 = vpack.c.b16 %v1470, %v1469
        %v1486 = vpack.c.b16 %v1472, %v1471
        %v1487 = vpack.c.b16 %v1474, %v1473
        %v1488 = vpack.c.b16 %v1476, %v1475
        %v1489 = vpack.c.b16 %v1478, %v1477
        %v1490 = vpack.c.b16 %v1480, %v1479
        %v1491 = vpack.c.b16 %v1482, %v1481
        %v1492 = vpack.c.b16 %v1484, %v1483
        %1501 = vmatprep.subr.bf16.mxu0 0
        %1502 = vmatpush1.bf16.msra.mxu0 %v1485
        %1503 = vmatprep.subr.bf16.mxu0 0
        %1504 = vmatpush1.bf16.msra.mxu0 %v1486
        %1505 = vmatprep.subr.bf16.mxu0 0
        %1506 = vmatpush1.bf16.msra.mxu0 %v1487
        %1507 = vmatprep.subr.bf16.mxu0 0
        %1508 = vmatpush1.bf16.msra.mxu0 %v1488
        %1509 = vmatprep.subr.bf16.mxu0 0
        %1510 = vmatpush1.bf16.msra.mxu0 %v1489
        %1511 = vmatprep.subr.bf16.mxu0 0
        %1512 = vmatpush1.bf16.msra.mxu0 %v1490
        %1513 = vmatprep.subr.bf16.mxu0 0
        %1514 = vmatpush1.bf16.msra.mxu0 %v1491
        %1515 = vmatprep.subr.bf16.mxu0 0
        %1516 = vmatpush1.bf16.msra.mxu0 %v1492
        %1517 = vmatprep.subr.bf16.mxu0 0
        %1518 = vmatpush1.bf16.msra.mxu0 0
        %1519 = vmatprep.subr.bf16.mxu0 0
        %1520 = vmatpush1.bf16.msra.mxu0 0
        %1521 = vmatprep.subr.bf16.mxu0 0
        %1522 = vmatpush1.bf16.msra.mxu0 0
        %1523 = vmatprep.subr.bf16.mxu0 0
        %1524 = vmatpush1.bf16.msra.mxu0 0
        %1525 = vmatprep.subr.bf16.mxu0 0
        %1526 = vmatpush1.bf16.msra.mxu0 0
        %1527 = vmatprep.subr.bf16.mxu0 0
        %1528 = vmatpush1.bf16.msra.mxu0 0
        %1529 = vmatprep.subr.bf16.mxu0 0
        %1530 = vmatpush1.bf16.msra.mxu0 0
        %1531 = vmatprep.subr.bf16.mxu0 0
        %1532 = vmatpush1.bf16.msra.mxu0 0
        %1533 = vmatprep.mubr.bf16.mxu0 0
        %1534 = vmatmul.mubr.bf16.gmra.mrb[0].mxu0 %v220
        %v1535 = vpop.f32.mrb[0].mxu0
        %v1536 = vadd.f32 0.0, %v1535
        %v1537 = vpop.f32.mrb[0].mxu0
        %v1538 = vpop.f32.mrb[0].mxu0
        %v1539 = vadd.f32 0.0, %v1538
        %v1540 = vpop.f32.mrb[0].mxu0
        %1541 = vmatprep.mubr.bf16.mxu0 0
        %1542 = vmatmul.mubr.bf16.gmra.mrb[0].mxu0 %v221
        %v1543 = vpop.f32.mrb[0].mxu0
        %v1544 = vadd.f32 0.0, %v1543
        %v1545 = vpop.f32.mrb[0].mxu0
        %v1546 = vpop.f32.mrb[0].mxu0
        %v1547 = vadd.f32 0.0, %v1546
        %v1548 = vpop.f32.mrb[0].mxu0
        %1549 = vmatprep.mubr.bf16.mxu0 0
        %1550 = vmatmul.mubr.bf16.gmra.mrb[0].mxu0 %v222
        %v1551 = vpop.f32.mrb[0].mxu0
        %v1552 = vadd.f32 0.0, %v1551
        %v1553 = vpop.f32.mrb[0].mxu0
        %v1554 = vpop.f32.mrb[0].mxu0
        %v1555 = vadd.f32 0.0, %v1554
        %v1556 = vpop.f32.mrb[0].mxu0
        %1557 = vmatprep.mubr.bf16.mxu0 0
        %1558 = vmatmul.mubr.bf16.gmra.mrb[0].mxu0 %v223
        %v1559 = vpop.f32.mrb[0].mxu0
        %v1560 = vadd.f32 0.0, %v1559
        %v1561 = vpop.f32.mrb[0].mxu0
        %v1562 = vpop.f32.mrb[0].mxu0
        %v1563 = vadd.f32 0.0, %v1562
        %v1564 = vpop.f32.mrb[0].mxu0
        %1565 = vmatprep.mubr.bf16.mxu0 0
        %1566 = vmatmul.mubr.bf16.gmra.mrb[0].mxu0 %v224
        %v1567 = vpop.f32.mrb[0].mxu0
        %v1568 = vadd.f32 0.0, %v1567
        %v1569 = vpop.f32.mrb[0].mxu0
        %v1570 = vpop.f32.mrb[0].mxu0
        %v1571 = vadd.f32 0.0, %v1570
        %v1572 = vpop.f32.mrb[0].mxu0
        %1573 = vmatprep.mubr.bf16.mxu0 0
        %1574 = vmatmul.mubr.bf16.gmra.mrb[0].mxu0 %v225
        %v1575 = vpop.f32.mrb[0].mxu0
        %v1576 = vadd.f32 0.0, %v1575
        %v1577 = vpop.f32.mrb[0].mxu0
        %v1578 = vpop.f32.mrb[0].mxu0
        %v1579 = vadd.f32 0.0, %v1578
        %v1580 = vpop.f32.mrb[0].mxu0
        %1581 = vmatprep.mubr.bf16.mxu0 0
        %1582 = vmatmul.mubr.bf16.gmra.mrb[0].mxu0 %v881
        %v1583 = vpop.f32.mrb[0].mxu0
        %v1584 = vadd.f32 0.0, %v1583
        %v1585 = vpop.f32.mrb[0].mxu0
        %v1586 = vpop.f32.mrb[0].mxu0
        %v1587 = vadd.f32 0.0, %v1586
        %v1588 = vpop.f32.mrb[0].mxu0
        %1589 = vmatprep.mubr.bf16.mxu0 0
        %1590 = vmatmul.mubr.bf16.gmra.mrb[0].mxu0 %v1435
        %v1591 = vpop.f32.mrb[0].mxu0
        %v1592 = vadd.f32 0.0, %v1591
        %v1593 = vpop.f32.mrb[0].mxu0
        %v1594 = vpop.f32.mrb[0].mxu0
        %v1595 = vadd.f32 0.0, %v1594
        %v1596 = vpop.f32.mrb[0].mxu0
        %1597 = vdwg.mxu0
        %v1598 = vadd.f32 %v1419, %v1536
        %v1599 = vadd.f32 %v1420, %v1539
        %v1600 = vadd.f32 %v1421, %v1544
        %v1601 = vadd.f32 %v1422, %v1547
        %v1602 = vadd.f32 %v1423, %v1552
        %v1603 = vadd.f32 %v1424, %v1555
        %v1604 = vadd.f32 %v1425, %v1560
        %v1605 = vadd.f32 %v1426, %v1563
        %v1606 = vadd.f32 %v1427, %v1568
        %v1607 = vadd.f32 %v1428, %v1571
        %v1608 = vadd.f32 %v1429, %v1576
        %v1609 = vadd.f32 %v1430, %v1579
        %v1610 = vadd.f32 %v1431, %v1584
        %v1611 = vadd.f32 %v1432, %v1587
        %v1612 = vadd.f32 %v1433, %v1592
        %v1613 = vadd.f32 %v1434, %v1595
        %v1617 = vrot.slane %v215, 1
        %v1618 = vrot.slane %v216, 1
        %v1619 = vsel %vm266, %v1617, %v1618
        %v1620 = vrot.slane %v217, 1
        %v1621 = vsel %vm266, %v1618, %v1620
        %v1624 = vpack.c.bf16 %v1621, %v1619
        %s1625 = scalar_lea.vmem %s1, 448
        %v1626 = vld [vmem:[%s1625] sm:$0xf]
        %v1627 = vld [vmem:[%s1625 + $0x4] sm:$0xf]
        %v1628 = vld [vmem:[%s1625 + $0x8] sm:$0xf]
        %v1629 = vld [vmem:[%s1625 + $0xc] sm:$0xf]
        %v1630 = vld [vmem:[%s1625 + $0x10] sm:$0xf]
        %v1631 = vld [vmem:[%s1625 + $0x14] sm:$0xf]
        %v1632 = vld [vmem:[%s1625 + $0x18] sm:$0xf]
        %v1633 = vld [vmem:[%s1625 + $0x1c] sm:$0xf]
        %v1634 = vld [vmem:[%s1625 + $0x20] sm:$0xf]
        %v1635 = vld [vmem:[%s1625 + $0x24] sm:$0xf]
        %v1636 = vld [vmem:[%s1625 + $0x28] sm:$0xf]
        %v1637 = vld [vmem:[%s1625 + $0x2c] sm:$0xf]
        %v1638 = vld [vmem:[%s1625 + $0x30] sm:$0xf]
        %v1639 = vld [vmem:[%s1625 + $0x34] sm:$0xf]
        %v1640 = vld [vmem:[%s1625 + $0x38] sm:$0xf]
        %v1641 = vld [vmem:[%s1625 + $0x3c] sm:$0xf]
        %v1658 = vunpack.c.l.b16 %v1626
        %v1659 = vunpack.c.l.b16 %v1627
        %v1660 = vunpack.c.l.b16 %v1628
        %v1661 = vunpack.c.l.b16 %v1629
        %v1662 = vunpack.c.l.b16 %v1630
        %v1663 = vunpack.c.l.b16 %v1631
        %v1664 = vunpack.c.l.b16 %v1632
        %v1665 = vunpack.c.l.b16 %v1633
        %v1666 = vunpack.c.l.b16 %v1634
        %v1667 = vunpack.c.l.b16 %v1635
        %v1668 = vunpack.c.l.b16 %v1636
        %v1669 = vunpack.c.l.b16 %v1637
        %v1670 = vunpack.c.l.b16 %v1638
        %v1671 = vunpack.c.l.b16 %v1639
        %v1672 = vunpack.c.l.b16 %v1640
        %v1673 = vunpack.c.l.b16 %v1641
        %v1674 = vpack.c.b16 %v1659, %v1658
        %v1675 = vpack.c.b16 %v1661, %v1660
        %v1676 = vpack.c.b16 %v1663, %v1662
        %v1677 = vpack.c.b16 %v1665, %v1664
        %v1678 = vpack.c.b16 %v1667, %v1666
        %v1679 = vpack.c.b16 %v1669, %v1668
        %v1680 = vpack.c.b16 %v1671, %v1670
        %v1681 = vpack.c.b16 %v1673, %v1672
        %1690 = vmatprep.subr.bf16.mxu0 0
        %1691 = vmatpush1.bf16.msra.mxu0 %v1674
        %1692 = vmatprep.subr.bf16.mxu0 0
        %1693 = vmatpush1.bf16.msra.mxu0 %v1675
        %1694 = vmatprep.subr.bf16.mxu0 0
        %1695 = vmatpush1.bf16.msra.mxu0 %v1676
        %1696 = vmatprep.subr.bf16.mxu0 0
        %1697 = vmatpush1.bf16.msra.mxu0 %v1677
        %1698 = vmatprep.subr.bf16.mxu0 0
        %1699 = vmatpush1.bf16.msra.mxu0 %v1678
        %1700 = vmatprep.subr.bf16.mxu0 0
        %1701 = vmatpush1.bf16.msra.mxu0 %v1679
        %1702 = vmatprep.subr.bf16.mxu0 0
        %1703 = vmatpush1.bf16.msra.mxu0 %v1680
        %1704 = vmatprep.subr.bf16.mxu0 0
        %1705 = vmatpush1.bf16.msra.mxu0 %v1681
        %1706 = vmatprep.subr.bf16.mxu0 0
        %1707 = vmatpush1.bf16.msra.mxu0 0
        %1708 = vmatprep.subr.bf16.mxu0 0
        %1709 = vmatpush1.bf16.msra.mxu0 0
        %1710 = vmatprep.subr.bf16.mxu0 0
        %1711 = vmatpush1.bf16.msra.mxu0 0
        %1712 = vmatprep.subr.bf16.mxu0 0
        %1713 = vmatpush1.bf16.msra.mxu0 0
        %1714 = vmatprep.subr.bf16.mxu0 0
        %1715 = vmatpush1.bf16.msra.mxu0 0
        %1716 = vmatprep.subr.bf16.mxu0 0
        %1717 = vmatpush1.bf16.msra.mxu0 0
        %1718 = vmatprep.subr.bf16.mxu0 0
        %1719 = vmatpush1.bf16.msra.mxu0 0
        %1720 = vmatprep.subr.bf16.mxu0 0
        %1721 = vmatpush1.bf16.msra.mxu0 0
        %1722 = vmatprep.mubr.bf16.mxu0 0
        %1723 = vmatmul.mubr.bf16.gmra.mrb[0].mxu0 %v325
        %v1724 = vpop.f32.mrb[0].mxu0
        %v1725 = vadd.f32 0.0, %v1724
        %v1726 = vpop.f32.mrb[0].mxu0
        %v1727 = vpop.f32.mrb[0].mxu0
        %v1728 = vadd.f32 0.0, %v1727
        %v1729 = vpop.f32.mrb[0].mxu0
        %1730 = vmatprep.mubr.bf16.mxu0 0
        %1731 = vmatmul.mubr.bf16.gmra.mrb[0].mxu0 %v326
        %v1732 = vpop.f32.mrb[0].mxu0
        %v1733 = vadd.f32 0.0, %v1732
        %v1734 = vpop.f32.mrb[0].mxu0
        %v1735 = vpop.f32.mrb[0].mxu0
        %v1736 = vadd.f32 0.0, %v1735
        %v1737 = vpop.f32.mrb[0].mxu0
        %1738 = vmatprep.mubr.bf16.mxu0 0
        %1739 = vmatmul.mubr.bf16.gmra.mrb[0].mxu0 %v327
        %v1740 = vpop.f32.mrb[0].mxu0
        %v1741 = vadd.f32 0.0, %v1740
        %v1742 = vpop.f32.mrb[0].mxu0
        %v1743 = vpop.f32.mrb[0].mxu0
        %v1744 = vadd.f32 0.0, %v1743
        %v1745 = vpop.f32.mrb[0].mxu0
        %1746 = vmatprep.mubr.bf16.mxu0 0
        %1747 = vmatmul.mubr.bf16.gmra.mrb[0].mxu0 %v328
        %v1748 = vpop.f32.mrb[0].mxu0
        %v1749 = vadd.f32 0.0, %v1748
        %v1750 = vpop.f32.mrb[0].mxu0
        %v1751 = vpop.f32.mrb[0].mxu0
        %v1752 = vadd.f32 0.0, %v1751
        %v1753 = vpop.f32.mrb[0].mxu0
        %1754 = vmatprep.mubr.bf16.mxu0 0
        %1755 = vmatmul.mubr.bf16.gmra.mrb[0].mxu0 %v329
        %v1756 = vpop.f32.mrb[0].mxu0
        %v1757 = vadd.f32 0.0, %v1756
        %v1758 = vpop.f32.mrb[0].mxu0
        %v1759 = vpop.f32.mrb[0].mxu0
        %v1760 = vadd.f32 0.0, %v1759
        %v1761 = vpop.f32.mrb[0].mxu0
        %1762 = vmatprep.mubr.bf16.mxu0 0
        %1763 = vmatmul.mubr.bf16.gmra.mrb[0].mxu0 %v330
        %v1764 = vpop.f32.mrb[0].mxu0
        %v1765 = vadd.f32 0.0, %v1764
        %v1766 = vpop.f32.mrb[0].mxu0
        %v1767 = vpop.f32.mrb[0].mxu0
        %v1768 = vadd.f32 0.0, %v1767
        %v1769 = vpop.f32.mrb[0].mxu0
        %1770 = vmatprep.mubr.bf16.mxu0 0
        %1771 = vmatmul.mubr.bf16.gmra.mrb[0].mxu0 %v1070
        %v1772 = vpop.f32.mrb[0].mxu0
        %v1773 = vadd.f32 0.0, %v1772
        %v1774 = vpop.f32.mrb[0].mxu0
        %v1775 = vpop.f32.mrb[0].mxu0
        %v1776 = vadd.f32 0.0, %v1775
        %v1777 = vpop.f32.mrb[0].mxu0
        %1778 = vmatprep.mubr.bf16.mxu0 0
        %1779 = vmatmul.mubr.bf16.gmra.mrb[0].mxu0 %v1624
        %v1780 = vpop.f32.mrb[0].mxu0
        %v1781 = vadd.f32 0.0, %v1780
        %v1782 = vpop.f32.mrb[0].mxu0
        %v1783 = vpop.f32.mrb[0].mxu0
        %v1784 = vadd.f32 0.0, %v1783
        %v1785 = vpop.f32.mrb[0].mxu0
        %1786 = vdwg.mxu0
        %v1787 = vadd.f32 %v1598, %v1725
        %v1788 = vadd.f32 %v1599, %v1728
        %v1789 = vadd.f32 %v1600, %v1733
        %v1790 = vadd.f32 %v1601, %v1736
        %v1791 = vadd.f32 %v1602, %v1741
        %v1792 = vadd.f32 %v1603, %v1744
        %v1793 = vadd.f32 %v1604, %v1749
        %v1794 = vadd.f32 %v1605, %v1752
        %v1795 = vadd.f32 %v1606, %v1757
        %v1796 = vadd.f32 %v1607, %v1760
        %v1797 = vadd.f32 %v1608, %v1765
        %v1798 = vadd.f32 %v1609, %v1768
        %v1799 = vadd.f32 %v1610, %v1773
        %v1800 = vadd.f32 %v1611, %v1776
        %v1801 = vadd.f32 %v1612, %v1781
        %v1802 = vadd.f32 %v1613, %v1784
        %v1803 = vrot.slane %v215, 2
        %v1804 = vrot.slane %v216, 2
        %v1805 = vsel %vm638, %v1803, %v1804
        %v1806 = vrot.slane %v217, 2
        %v1807 = vsel %vm638, %v1804, %v1806
        %v1810 = vpack.c.bf16 %v1807, %v1805
        %s1811 = scalar_lea.vmem %s1, 512
        %v1812 = vld [vmem:[%s1811] sm:$0xf]
        %v1813 = vld [vmem:[%s1811 + $0x4] sm:$0xf]
        %v1814 = vld [vmem:[%s1811 + $0x8] sm:$0xf]
        %v1815 = vld [vmem:[%s1811 + $0xc] sm:$0xf]
        %v1816 = vld [vmem:[%s1811 + $0x10] sm:$0xf]
        %v1817 = vld [vmem:[%s1811 + $0x14] sm:$0xf]
        %v1818 = vld [vmem:[%s1811 + $0x18] sm:$0xf]
        %v1819 = vld [vmem:[%s1811 + $0x1c] sm:$0xf]
        %v1820 = vld [vmem:[%s1811 + $0x20] sm:$0xf]
        %v1821 = vld [vmem:[%s1811 + $0x24] sm:$0xf]
        %v1822 = vld [vmem:[%s1811 + $0x28] sm:$0xf]
        %v1823 = vld [vmem:[%s1811 + $0x2c] sm:$0xf]
        %v1824 = vld [vmem:[%s1811 + $0x30] sm:$0xf]
        %v1825 = vld [vmem:[%s1811 + $0x34] sm:$0xf]
        %v1826 = vld [vmem:[%s1811 + $0x38] sm:$0xf]
        %v1827 = vld [vmem:[%s1811 + $0x3c] sm:$0xf]
        %v1844 = vunpack.c.l.b16 %v1812
        %v1845 = vunpack.c.l.b16 %v1813
        %v1846 = vunpack.c.l.b16 %v1814
        %v1847 = vunpack.c.l.b16 %v1815
        %v1848 = vunpack.c.l.b16 %v1816
        %v1849 = vunpack.c.l.b16 %v1817
        %v1850 = vunpack.c.l.b16 %v1818
        %v1851 = vunpack.c.l.b16 %v1819
        %v1852 = vunpack.c.l.b16 %v1820
        %v1853 = vunpack.c.l.b16 %v1821
        %v1854 = vunpack.c.l.b16 %v1822
        %v1855 = vunpack.c.l.b16 %v1823
        %v1856 = vunpack.c.l.b16 %v1824
        %v1857 = vunpack.c.l.b16 %v1825
        %v1858 = vunpack.c.l.b16 %v1826
        %v1859 = vunpack.c.l.b16 %v1827
        %v1860 = vpack.c.b16 %v1845, %v1844
        %v1861 = vpack.c.b16 %v1847, %v1846
        %v1862 = vpack.c.b16 %v1849, %v1848
        %v1863 = vpack.c.b16 %v1851, %v1850
        %v1864 = vpack.c.b16 %v1853, %v1852
        %v1865 = vpack.c.b16 %v1855, %v1854
        %v1866 = vpack.c.b16 %v1857, %v1856
        %v1867 = vpack.c.b16 %v1859, %v1858
        %1876 = vmatprep.subr.bf16.mxu0 0
        %1877 = vmatpush1.bf16.msra.mxu0 %v1860
        %1878 = vmatprep.subr.bf16.mxu0 0
        %1879 = vmatpush1.bf16.msra.mxu0 %v1861
        %1880 = vmatprep.subr.bf16.mxu0 0
        %1881 = vmatpush1.bf16.msra.mxu0 %v1862
        %1882 = vmatprep.subr.bf16.mxu0 0
        %1883 = vmatpush1.bf16.msra.mxu0 %v1863
        %1884 = vmatprep.subr.bf16.mxu0 0
        %1885 = vmatpush1.bf16.msra.mxu0 %v1864
        %1886 = vmatprep.subr.bf16.mxu0 0
        %1887 = vmatpush1.bf16.msra.mxu0 %v1865
        %1888 = vmatprep.subr.bf16.mxu0 0
        %1889 = vmatpush1.bf16.msra.mxu0 %v1866
        %1890 = vmatprep.subr.bf16.mxu0 0
        %1891 = vmatpush1.bf16.msra.mxu0 %v1867
        %1892 = vmatprep.subr.bf16.mxu0 0
        %1893 = vmatpush1.bf16.msra.mxu0 0
        %1894 = vmatprep.subr.bf16.mxu0 0
        %1895 = vmatpush1.bf16.msra.mxu0 0
        %1896 = vmatprep.subr.bf16.mxu0 0
        %1897 = vmatpush1.bf16.msra.mxu0 0
        %1898 = vmatprep.subr.bf16.mxu0 0
        %1899 = vmatpush1.bf16.msra.mxu0 0
        %1900 = vmatprep.subr.bf16.mxu0 0
        %1901 = vmatpush1.bf16.msra.mxu0 0
        %1902 = vmatprep.subr.bf16.mxu0 0
        %1903 = vmatpush1.bf16.msra.mxu0 0
        %1904 = vmatprep.subr.bf16.mxu0 0
        %1905 = vmatpush1.bf16.msra.mxu0 0
        %1906 = vmatprep.subr.bf16.mxu0 0
        %1907 = vmatpush1.bf16.msra.mxu0 0
        %1908 = vmatprep.mubr.bf16.mxu0 0
        %1909 = vmatmul.mubr.bf16.gmra.mrb[0].mxu0 %v697
        %v1910 = vpop.f32.mrb[0].mxu0
        %v1911 = vadd.f32 0.0, %v1910
        %v1912 = vpop.f32.mrb[0].mxu0
        %v1913 = vpop.f32.mrb[0].mxu0
        %v1914 = vadd.f32 0.0, %v1913
        %v1915 = vpop.f32.mrb[0].mxu0
        %1916 = vmatprep.mubr.bf16.mxu0 0
        %1917 = vmatmul.mubr.bf16.gmra.mrb[0].mxu0 %v698
        %v1918 = vpop.f32.mrb[0].mxu0
        %v1919 = vadd.f32 0.0, %v1918
        %v1920 = vpop.f32.mrb[0].mxu0
        %v1921 = vpop.f32.mrb[0].mxu0
        %v1922 = vadd.f32 0.0, %v1921
        %v1923 = vpop.f32.mrb[0].mxu0
        %1924 = vmatprep.mubr.bf16.mxu0 0
        %1925 = vmatmul.mubr.bf16.gmra.mrb[0].mxu0 %v699
        %v1926 = vpop.f32.mrb[0].mxu0
        %v1927 = vadd.f32 0.0, %v1926
        %v1928 = vpop.f32.mrb[0].mxu0
        %v1929 = vpop.f32.mrb[0].mxu0
        %v1930 = vadd.f32 0.0, %v1929
        %v1931 = vpop.f32.mrb[0].mxu0
        %1932 = vmatprep.mubr.bf16.mxu0 0
        %1933 = vmatmul.mubr.bf16.gmra.mrb[0].mxu0 %v700
        %v1934 = vpop.f32.mrb[0].mxu0
        %v1935 = vadd.f32 0.0, %v1934
        %v1936 = vpop.f32.mrb[0].mxu0
        %v1937 = vpop.f32.mrb[0].mxu0
        %v1938 = vadd.f32 0.0, %v1937
        %v1939 = vpop.f32.mrb[0].mxu0
        %1940 = vmatprep.mubr.bf16.mxu0 0
        %1941 = vmatmul.mubr.bf16.gmra.mrb[0].mxu0 %v701
        %v1942 = vpop.f32.mrb[0].mxu0
        %v1943 = vadd.f32 0.0, %v1942
        %v1944 = vpop.f32.mrb[0].mxu0
        %v1945 = vpop.f32.mrb[0].mxu0
        %v1946 = vadd.f32 0.0, %v1945
        %v1947 = vpop.f32.mrb[0].mxu0
        %1948 = vmatprep.mubr.bf16.mxu0 0
        %1949 = vmatmul.mubr.bf16.gmra.mrb[0].mxu0 %v702
        %v1950 = vpop.f32.mrb[0].mxu0
        %v1951 = vadd.f32 0.0, %v1950
        %v1952 = vpop.f32.mrb[0].mxu0
        %v1953 = vpop.f32.mrb[0].mxu0
        %v1954 = vadd.f32 0.0, %v1953
        %v1955 = vpop.f32.mrb[0].mxu0
        %1956 = vmatprep.mubr.bf16.mxu0 0
        %1957 = vmatmul.mubr.bf16.gmra.mrb[0].mxu0 %v1256
        %v1958 = vpop.f32.mrb[0].mxu0
        %v1959 = vadd.f32 0.0, %v1958
        %v1960 = vpop.f32.mrb[0].mxu0
        %v1961 = vpop.f32.mrb[0].mxu0
        %v1962 = vadd.f32 0.0, %v1961
        %v1963 = vpop.f32.mrb[0].mxu0
        %1964 = vmatprep.mubr.bf16.mxu0 0
        %1965 = vmatmul.mubr.bf16.gmra.mrb[0].mxu0 %v1810
        %v1966 = vpop.f32.mrb[0].mxu0
        %v1967 = vadd.f32 0.0, %v1966
        %v1968 = vpop.f32.mrb[0].mxu0
        %v1969 = vpop.f32.mrb[0].mxu0
        %v1970 = vadd.f32 0.0, %v1969
        %v1971 = vpop.f32.mrb[0].mxu0
        %1972 = vdwg.mxu0
        %v1973 = vadd.f32 %v1787, %v1911
        %v1974 = vadd.f32 %v1788, %v1914
        %v1975 = vadd.f32 %v1789, %v1919
        %v1976 = vadd.f32 %v1790, %v1922
        %v1977 = vadd.f32 %v1791, %v1927
        %v1978 = vadd.f32 %v1792, %v1930
        %v1979 = vadd.f32 %v1793, %v1935
        %v1980 = vadd.f32 %v1794, %v1938
        %v1981 = vadd.f32 %v1795, %v1943
        %v1982 = vadd.f32 %v1796, %v1946
        %v1983 = vadd.f32 %v1797, %v1951
        %v1984 = vadd.f32 %v1798, %v1954
        %v1985 = vadd.f32 %v1799, %v1959
        %v1986 = vadd.f32 %v1800, %v1962
        %v1987 = vadd.f32 %v1801, %v1967
        %v1988 = vadd.f32 %v1802, %v1970
        %v1989 = vld [vmem:[%s2] sm:$0x1]
        %v1991 = vlaneseq
        %v1992 = vshrl.u32 %v1991, 7
        %v1993 = vsub.s32 0, %v1992
        %v1994 = vrot.slane %v1989, %v1993
        %v1996 = vadd.f32 %v1973, %v1994
        %v1997 = vadd.f32 %v1974, %v1994
        %v1998 = vadd.f32 %v1975, %v1994
        %v1999 = vadd.f32 %v1976, %v1994
        %v2000 = vadd.f32 %v1977, %v1994
        %v2001 = vadd.f32 %v1978, %v1994
        %v2002 = vadd.f32 %v1979, %v1994
        %v2003 = vadd.f32 %v1980, %v1994
        %v2004 = vadd.f32 %v1981, %v1994
        %v2005 = vadd.f32 %v1982, %v1994
        %v2006 = vadd.f32 %v1983, %v1994
        %v2007 = vadd.f32 %v1984, %v1994
        %v2008 = vadd.f32 %v1985, %v1994
        %v2009 = vadd.f32 %v1986, %v1994
        %v2010 = vadd.f32 %v1987, %v1994
        %v2011 = vadd.f32 %v1988, %v1994
        %v2012 = vmax.f32 %v1996, 0.0
        %v2013 = vmax.f32 %v1997, 0.0
        %v2014 = vmax.f32 %v1998, 0.0
        %v2015 = vmax.f32 %v1999, 0.0
        %v2016 = vmax.f32 %v2000, 0.0
        %v2017 = vmax.f32 %v2001, 0.0
        %v2018 = vmax.f32 %v2002, 0.0
        %v2019 = vmax.f32 %v2003, 0.0
        %v2020 = vmax.f32 %v2004, 0.0
        %v2021 = vmax.f32 %v2005, 0.0
        %v2022 = vmax.f32 %v2006, 0.0
        %v2023 = vmax.f32 %v2007, 0.0
        %v2024 = vmax.f32 %v2008, 0.0
        %v2025 = vmax.f32 %v2009, 0.0
        %v2026 = vmax.f32 %v2010, 0.0
        %v2027 = vmax.f32 %v2011, 0.0
        %v2028 = vmin.f32 %v2012, 6.0
        %v2029 = vmin.f32 %v2013, 6.0
        %v2030 = vmin.f32 %v2014, 6.0
        %v2031 = vmin.f32 %v2015, 6.0
        %v2032 = vmin.f32 %v2016, 6.0
        %v2033 = vmin.f32 %v2017, 6.0
        %v2034 = vmin.f32 %v2018, 6.0
        %v2035 = vmin.f32 %v2019, 6.0
        %v2036 = vmin.f32 %v2020, 6.0
        %v2037 = vmin.f32 %v2021, 6.0
        %v2038 = vmin.f32 %v2022, 6.0
        %v2039 = vmin.f32 %v2023, 6.0
        %v2040 = vmin.f32 %v2024, 6.0
        %v2041 = vmin.f32 %v2025, 6.0
        %v2042 = vmin.f32 %v2026, 6.0
        %v2043 = vmin.f32 %v2027, 6.0
        %2044 = vst [vmem:[%s177] sm:$0xff] %v2028
        %2045 = vst [vmem:[%s177 + $0x8] sm:$0xff] %v2029
        %2046 = vst [vmem:[%s177 + $0x10] sm:$0xff] %v2030
        %2047 = vst [vmem:[%s177 + $0x18] sm:$0xff] %v2031
        %2048 = vst [vmem:[%s177 + $0x20] sm:$0xff] %v2032
        %2049 = vst [vmem:[%s177 + $0x28] sm:$0xff] %v2033
        %2050 = vst [vmem:[%s177 + $0x30] sm:$0xff] %v2034
        %2051 = vst [vmem:[%s177 + $0x38] sm:$0xff] %v2035
        %2052 = vst [vmem:[%s177 + $0x40] sm:$0xff] %v2036
        %2053 = vst [vmem:[%s177 + $0x48] sm:$0xff] %v2037
        %2054 = vst [vmem:[%s177 + $0x50] sm:$0xff] %v2038
        %2055 = vst [vmem:[%s177 + $0x58] sm:$0xff] %v2039
        %2056 = vst [vmem:[%s177 + $0x60] sm:$0xff] %v2040
        %2057 = vst [vmem:[%s177 + $0x68] sm:$0xff] %v2041
        %2058 = vst [vmem:[%s177 + $0x70] sm:$0xff] %v2042
        %2059 = vst [vmem:[%s177 + $0x78] sm:$0xff] %v2043
        %s2060 = sand.u32 %s107, 1
        %s2061 = scalar_lea.sflag [#allocation3], %s2060
        %s2062 = sand.u32 %s107, 1
        %s2063 = smul.addr %s2062, 128
        %s2064 = scalar_lea.vmem [#allocation2], %s2063
        // Predicated region
        $region33: #{tpu_custom_call.1} parent=31 // pred_check
          %p2065 = pneg %p117
        $region34: #{tpu_custom_call.1} parent=31 // pred_check_branch
          %2067 = sbr.rel (%p2065) target = $region36
        $region35: #{tpu_custom_call.1} parent=31 // pred_region
          %s2068 = smul.u32 8, %s22
          %s2070 = ssub.s32 2048, 2048
          %2071 = vsyncadd %s2061, %s2070
          %s2072 = smul.addr %s2068, 2
          %s2073 = smul.addr %s21, 32
          %s2074 = sadd.s32 %s2072, %s2073
          %s2075 = smul.addr %s2074, 128
          %s2076 = scalar_lea.hbm %s3, %s2075
          %s2077 = sshll.u32 %s2064, 4
          %s2078 = int_to_ptr.vmem [resolvable:$true] %s2077
          %2083 = dma.vmem_to_hbm [thread:$0]  %s2078, 2048, %s2076, %s2061, 128, 128, 8
        $region36: #{tpu_custom_call.1} parent=31 // pred_fallthru
          _
      $region32: #{tpu_custom_call.1} parent=5 // pred_fallthru
        _
      %p2084 = scmp.le.s32.totalorder 2, %s12
      // Predicated region
      $region37: #{tpu_custom_call.1} parent=5 // pred_check
        %p2085 = pneg %p2084
      $region38: #{tpu_custom_call.1} parent=5 // pred_check_branch
        %2087 = sbr.rel (%p2085) target = $region40
      $region39: #{tpu_custom_call.1} parent=5 // pred_region
        %s2088 = ssub.s32 %s12, 2
        // Predicated region
        $region41: #{tpu_custom_call.1} parent=39 // pred_check
          %p2089 = pneg %p123
        $region42: #{tpu_custom_call.1} parent=39 // pred_check_branch
          %2091 = sbr.rel (%p2089) target = $region44
        $region43: #{tpu_custom_call.1} parent=39 // pred_region
          %s2092 = sand.u32 %s108, 1
          %s2093 = scalar_lea.sflag [#allocation3], %s2092
          %s2094 = sand.u32 %s108, 1
          %s2095 = smul.addr %s2094, 128
          %s2096 = scalar_lea.vmem [#allocation2], %s2095
          %2097 = dma.done %s2093, 2048
        $region44: #{tpu_custom_call.1} parent=39 // pred_fallthru
          _
      $region40: #{tpu_custom_call.1} parent=5 // pred_fallthru
        _
    $region6: #{tpu_custom_call.1} parent=1 // loop_footer
      %s16 = sadd.s32 1, %s12
    $region7: #{tpu_custom_call.1} parent=1 // loop_footer_branch
      %11 = sbr.rel target = $region3
    $region8: #{tpu_custom_call.1} parent=1 // loop_exit
      _
    %2098 = vsyncpa [#allocation3], 1
    %s2099 = scalar_lea.sflag [#allocation3], 1
    %2100 = vsyncpa %s2099, 1

</llo_original>
